<compile_context>
chip_gen: v7x
topology: tpu7x:2x2x1
jax: 0.10.0
libtpu: 0.0.40
codegen_flags: <defaults>
</compile_context>

<pallas_src>
import functools

import jax
import jax.numpy as jnp
from jax.experimental import pallas as pl
from jax.experimental.pallas import tpu as pltpu

LANE = 128


def _round_up(x, m):
    return ((x + m - 1) // m) * m


# ---------------------------------------------------------------------------
# Fused kernel: edge_fc -> u_mul_e -> scatter-sum(dst) -> head (fc_self/fc_neigh
# + BN shift + ReLU + L2 norm).  Grid = (dst tiles ["parallel"], edge tiles
# ["arbitrary", innermost]).  The per-dst-tile packed accumulator lives in VMEM
# scratch; the output tile is written only on the last edge tile.
# ---------------------------------------------------------------------------
def _fused_conv_kernel(ef_ref, hgr_ref, dst_ref, we_ref, hs_ref, ws_ref,
                       wn_ref, bs_ref, bn_ref, z_ref, hn_acc, *, block_dst):
    d = pl.program_id(0)                       # dst tile   ("parallel")
    e = pl.program_id(1)                       # edge tile  ("arbitrary")

    @pl.when(e == 0)
    def _():
        hn_acc[...] = jnp.zeros_like(hn_acc)
        z_ref[...] = jnp.zeros_like(z_ref)     # deterministic content pre-finalize

    # edge_fc: single wide lane-dense matmul + one ReLU (bf16 operands, f32 acc).
    ew = jnp.dot(ef_ref[...], we_ref[...], preferred_element_type=jnp.float32)
    ew = jnp.maximum(ew, 0.0)

    # u_mul_e in the packed layout: hgr[e, i*out + o] = h_neigh[src[e], i].
    m = (hgr_ref[...].astype(jnp.float32) * ew).astype(jnp.bfloat16)

    # Scatter-sum over the current dst window: in-register one-hot built from the
    # int32 dst tile already in VMEM, accumulated on the MXU into VMEM scratch.
    dvals = dst_ref[...]                                            # (1, block_e)
    rows = jax.lax.broadcasted_iota(jnp.int32, (block_dst, dvals.shape[1]), 0)
    onehot_t = ((rows + d * block_dst) == dvals).astype(jnp.bfloat16)
    hn_acc[...] += jnp.dot(onehot_t, m, preferred_element_type=jnp.float32)

    # Finalize on the last edge tile: fc_self / fc_neigh (BN scale pre-folded into
    # the weights, shift added here), outer ReLU, safe row-wise L2 normalization.
    @pl.when(e == pl.num_programs(1) - 1)
    def _():
        a = jnp.dot(hs_ref[...], ws_ref[...], preferred_element_type=jnp.float32)
        a = jnp.maximum(a + bs_ref[...], 0.0)
        b = jnp.dot(hn_acc[...].astype(jnp.bfloat16), wn_ref[...],
                    preferred_element_type=jnp.float32)
        b = jnp.maximum(b + bn_ref[...], 0.0)
        z = jnp.maximum(a + b, 0.0)
        sq = jnp.sum(z * z, axis=-1, keepdims=True)
        inv = jnp.where(sq > 0.0, jax.lax.rsqrt(sq), 1.0)   # ||z|| == 0 -> divide by 1
        z_ref[...] = (z * inv).astype(z_ref.dtype)


# ---------------------------------------------------------------------------
# Full ConvLayer forward (padding / weight repacking glue in plain JAX, all hot
# compute in the single fused Pallas kernel above).
# ---------------------------------------------------------------------------
def conv_layer_forward(params, src, dst, h_neigh, h_self, edge_features,
                       n_dst, in_neigh, out_feats, *, block_e=512, block_dst=256):
    E, edge_dim = edge_features.shape
    in_self = h_self.shape[1]
    io = in_neigh * out_feats

    P = _round_up(io, LANE)                  # packed message width (lane-dense)
    out_p = _round_up(out_feats, LANE)       # lane-dense head output
    e_pad = _round_up(E, block_e)
    block_dst = min(block_dst, _round_up(n_dst, 8))
    n_dst_p = _round_up(n_dst, block_dst)

    # Source row gather + packed replication (dropout(h_neigh) = identity in eval).
    h_gather = jnp.take(h_neigh, src, axis=0)                        # [E, in_neigh]
    hgr = jnp.repeat(h_gather, out_feats, axis=1)                    # [E, in_neigh*out]
    hgr = jnp.pad(hgr, ((0, e_pad - E), (0, P - io))).astype(jnp.bfloat16)

    ef_p = jnp.pad(edge_features, ((0, e_pad - E), (0, 0))).astype(jnp.bfloat16)
    dst_p = jnp.pad(dst.astype(jnp.int32), (0, e_pad - E),
                    constant_values=n_dst_p)         # sentinel: matches no dst row
    dst3 = dst_p.reshape(e_pad // block_e, 1, block_e)

    w_edge_p = jnp.pad(params["w_edge"], ((0, 0), (0, P - io))).astype(jnp.bfloat16)

    # Head weights: fold the BN scale in ((h@W)*s == h@(W*s)); row-stack W_neigh
    # in_neigh times so contracting the packed accumulator also performs the sum
    # over in_neigh for free on the MXU.
    ws_eff = jnp.pad(params["w_self"] * params["bn_s_scale"],
                     ((0, 0), (0, out_p - out_feats))).astype(jnp.bfloat16)
    wn_stacked = jnp.tile(params["w_neigh"] * params["bn_n_scale"], (in_neigh, 1))
    wn_eff = jnp.pad(wn_stacked,
                     ((0, P - io), (0, out_p - out_feats))).astype(jnp.bfloat16)
    bs_shift = jnp.pad(params["bn_s_shift"], ((0, 0), (0, out_p - out_feats)))
    bn_shift = jnp.pad(params["bn_n_shift"], ((0, 0), (0, out_p - out_feats)))
    h_self_p = jnp.pad(h_self, ((0, n_dst_p - n_dst), (0, 0))).astype(jnp.bfloat16)

    kernel = functools.partial(_fused_conv_kernel, block_dst=block_dst)
    z_p = pl.pallas_call(
        kernel,
        out_shape=jax.ShapeDtypeStruct((n_dst_p, out_p), jnp.float32),
        grid=(n_dst_p // block_dst, e_pad // block_e),
        in_specs=[
            pl.BlockSpec((block_e, edge_dim), lambda d, e: (e, 0)),
            pl.BlockSpec((block_e, P), lambda d, e: (e, 0)),
            pl.BlockSpec((None, 1, block_e), lambda d, e: (e, 0, 0)),
            pl.BlockSpec((edge_dim, P), lambda d, e: (0, 0)),
            pl.BlockSpec((block_dst, in_self), lambda d, e: (d, 0)),
            pl.BlockSpec((in_self, out_p), lambda d, e: (0, 0)),
            pl.BlockSpec((P, out_p), lambda d, e: (0, 0)),
            pl.BlockSpec((1, out_p), lambda d, e: (0, 0)),
            pl.BlockSpec((1, out_p), lambda d, e: (0, 0)),
        ],
        out_specs=pl.BlockSpec((block_dst, out_p), lambda d, e: (d, 0)),
        scratch_shapes=[pltpu.VMEM((block_dst, P), jnp.float32)],
        compiler_params=pltpu.CompilerParams(
            dimension_semantics=("parallel", "arbitrary"),
            vmem_limit_bytes=48 * 1024 * 1024),
    )(ef_p, hgr, dst3, w_edge_p, h_self_p, ws_eff, wn_eff, bs_shift, bn_shift)

    return z_p[:n_dst, :out_feats]


# ---------------------------------------------------------------------------
# Pure-JAX f32 reference (independent path) for correctness check.
# ---------------------------------------------------------------------------
def reference_forward(params, src, dst, h_neigh, h_self, edge_features,
                      n_dst, in_neigh, out_feats):
    E = edge_features.shape[0]
    ew = jnp.maximum(edge_features @ params["w_edge"], 0.0)
    ew = ew.reshape(E, in_neigh, out_feats)
    m = h_neigh[src][:, :, None] * ew                                # [E, in, out]
    neigh = jnp.zeros((n_dst, in_neigh, out_feats), jnp.float32).at[dst].add(m)
    h_n = neigh.sum(axis=1)
    a = jnp.maximum((h_self @ params["w_self"]) * params["bn_s_scale"]
                    + params["bn_s_shift"], 0.0)
    b = jnp.maximum((h_n @ params["w_neigh"]) * params["bn_n_scale"]
                    + params["bn_n_shift"], 0.0)
    z = jnp.maximum(a + b, 0.0)
    nrm = jnp.linalg.norm(z, axis=1, keepdims=True)
    nrm = jnp.where(nrm == 0.0, 1.0, nrm)
    return z / nrm


def xavier_uniform(key, fan_in, fan_out, gain):
    bound = gain * jnp.sqrt(6.0 / (fan_in + fan_out))
    return jax.random.uniform(key, (fan_in, fan_out), jnp.float32, -bound, bound)


if __name__ == "__main__":
    # Small shapes consistent with the module (exercise padding paths).
    N_SRC, N_DST, E = 32, 24, 200
    IN_NEIGH, IN_SELF, OUT, EDGE_DIM = 8, 12, 16, 8

    key = jax.random.PRNGKey(0)
    ks = jax.random.split(key, 8)
    gain = jnp.sqrt(2.0)  # nn.init.calculate_gain('relu')

    h_neigh = jax.random.normal(ks[0], (N_SRC, IN_NEIGH), jnp.float32)
    h_self = jax.random.normal(ks[1], (N_DST, IN_SELF), jnp.float32)
    edge_features = jax.random.normal(ks[2], (E, EDGE_DIM), jnp.float32)
    src = jax.random.randint(ks[3], (E,), 0, N_SRC)
    dst = jax.random.randint(ks[4], (E,), 0, N_DST)

    eps = 1e-5  # BatchNorm1d eval mode with fresh running stats / affine params.
    params = {
        "w_edge": xavier_uniform(ks[5], EDGE_DIM, IN_NEIGH * OUT, gain),
        "w_self": xavier_uniform(ks[6], IN_SELF, OUT, gain),
        # fc_neigh[0] keeps PyTorch default init (reset_parameters does not re-init it).
        "w_neigh": jax.random.uniform(ks[7], (OUT, OUT), jnp.float32,
                                      -1.0 / jnp.sqrt(OUT), 1.0 / jnp.sqrt(OUT)),
        "bn_s_scale": jnp.full((1, OUT), 1.0 / jnp.sqrt(1.0 + eps), jnp.float32),
        "bn_s_shift": jnp.zeros((1, OUT), jnp.float32),
        "bn_n_scale": jnp.full((1, OUT), 1.0 / jnp.sqrt(1.0 + eps), jnp.float32),
        "bn_n_shift": jnp.zeros((1, OUT), jnp.float32),
    }

    z = conv_layer_forward(params, src, dst, h_neigh, h_self, edge_features,
                           N_DST, IN_NEIGH, OUT)
    z = jax.block_until_ready(z)

    z_ref = reference_forward(params, src, dst, h_neigh, h_self, edge_features,
                              N_DST, IN_NEIGH, OUT)
    assert z.shape == (N_DST, OUT)
    # bf16 MXU operands (f32 accumulation) vs. the f32 reference: loosened tolerance.
    err = float(jnp.max(jnp.abs(z - z_ref)))
    assert jnp.allclose(z, z_ref, rtol=5e-2, atol=5e-2), f"mismatch vs ref: {err}"

    print("KERNEL_OK")
</pallas_src>

<mosaic_0001>
module attributes {stable_mosaic.version = 11 : i64} {
  func.func @_fused_conv_kernel(%arg0: i32, %arg1: i32, %arg2: memref<512x8xbf16, #tpu.memory_space<vmem>>, %arg3: memref<512x128xbf16, #tpu.memory_space<vmem>>, %arg4: memref<1x1x512xi32, #tpu.memory_space<vmem>>, %arg5: memref<8x128xbf16, #tpu.memory_space<vmem>>, %arg6: memref<24x12xbf16, #tpu.memory_space<vmem>>, %arg7: memref<12x128xbf16, #tpu.memory_space<vmem>>, %arg8: memref<128x128xbf16, #tpu.memory_space<vmem>>, %arg9: memref<1x128xf32, #tpu.memory_space<vmem>>, %arg10: memref<1x128xf32, #tpu.memory_space<vmem>>, %arg11: memref<24x128xf32, #tpu.memory_space<vmem>>, %arg12: memref<24x128xf32, #tpu.memory_space<vmem>>) attributes {dimension_semantics = [#tpu.dimension_semantics<parallel>, #tpu.dimension_semantics<arbitrary>], iteration_bounds = array<i64: 1, 1>, scalar_prefetch = 0 : i64, scratch_operands = 1 : i64, tpu.core_type = #tpu.core_type<tc>, window_params = [{transform_indices = @transform_0, window_bounds = array<i64: 512, 8>}, {transform_indices = @transform_1, window_bounds = array<i64: 512, 128>}, {transform_indices = @transform_2, window_bounds = array<i64: 1, 1, 512>}, {pipeline_mode = #tpu.pipeline_mode<synchronous>, transform_indices = @transform_3, window_bounds = array<i64: 8, 128>}, {transform_indices = @transform_4, window_bounds = array<i64: 24, 12>}, {pipeline_mode = #tpu.pipeline_mode<synchronous>, transform_indices = @transform_5, window_bounds = array<i64: 12, 128>}, {pipeline_mode = #tpu.pipeline_mode<synchronous>, transform_indices = @transform_6, window_bounds = array<i64: 128, 128>}, {pipeline_mode = #tpu.pipeline_mode<synchronous>, transform_indices = @transform_7, window_bounds = array<i64: 1, 128>}, {pipeline_mode = #tpu.pipeline_mode<synchronous>, transform_indices = @transform_8, window_bounds = array<i64: 1, 128>}, {transform_indices = @transform_9, window_bounds = array<i64: 24, 128>}]} {
    %c0_i32 = arith.constant 0 : i32
    %0 = arith.cmpi eq, %arg1, %c0_i32 : i32
    %1 = arith.extui %0 : i1 to i32
    %c0_i32_0 = arith.constant 0 : i32
    %2 = arith.cmpi ne, %1, %c0_i32_0 : i32
    scf.if %2 {
      %cst_17 = arith.constant 0.000000e+00 : f32
      %30 = vector.broadcast %cst_17 : f32 to vector<24x128xf32>
      %c0_18 = arith.constant 0 : index
      %c0_19 = arith.constant 0 : index
      %31 = vector.load %arg12[%c0_18, %c0_19] : memref<24x128xf32, #tpu.memory_space<vmem>>, vector<24x128xf32>
      tpu.vector_store %arg12[%c0_18, %c0_19], %30 {strides = array<i32>} : memref<24x128xf32, #tpu.memory_space<vmem>>, vector<24x128xf32>,
      %cst_20 = arith.constant 0.000000e+00 : f32
      %32 = vector.broadcast %cst_20 : f32 to vector<24x128xf32>
      %c0_21 = arith.constant 0 : index
      %c0_22 = arith.constant 0 : index
      %33 = vector.load %arg11[%c0_21, %c0_22] : memref<24x128xf32, #tpu.memory_space<vmem>>, vector<24x128xf32>
      tpu.vector_store %arg11[%c0_21, %c0_22], %32 {strides = array<i32>} : memref<24x128xf32, #tpu.memory_space<vmem>>, vector<24x128xf32>,
    } else {
    }
    %c0 = arith.constant 0 : index
    %c0_1 = arith.constant 0 : index
    %3 = vector.load %arg2[%c0, %c0_1] : memref<512x8xbf16, #tpu.memory_space<vmem>>, vector<512x8xbf16>
    %c0_2 = arith.constant 0 : index
    %c0_3 = arith.constant 0 : index
    %4 = vector.load %arg5[%c0_2, %c0_3] : memref<8x128xbf16, #tpu.memory_space<vmem>>, vector<8x128xbf16>
    %cst = arith.constant dense<0.000000e+00> : vector<512x128xf32>
    %5 = tpu.matmul %3, %4, %cst {dimension_numbers = #tpu.dot_dimension_numbers<[1], [0], [0], [1], [0, 0, 1, 1], [], []>} : vector<512x8xbf16>, vector<8x128xbf16>, vector<512x128xf32> -> vector<512x128xf32>
    %cst_4 = arith.constant 0.000000e+00 : f32
    %6 = vector.broadcast %cst_4 : f32 to vector<512x128xf32>
    %7 = arith.maximumf %5, %6 : vector<512x128xf32>
    %c0_5 = arith.constant 0 : index
    %c0_6 = arith.constant 0 : index
    %8 = vector.load %arg3[%c0_5, %c0_6] : memref<512x128xbf16, #tpu.memory_space<vmem>>, vector<512x128xbf16>
    %9 = arith.extf %8 : vector<512x128xbf16> to vector<512x128xf32>
    %10 = arith.mulf %9, %7 : vector<512x128xf32>
    %11 = arith.truncf %10 : vector<512x128xf32> to vector<512x128xbf16>
    %c0_7 = arith.constant 0 : index
    %c0_8 = arith.constant 0 : index
    %c0_9 = arith.constant 0 : index
    %12 = vector.load %arg4[%c0_7, %c0_8, %c0_9] : memref<1x1x512xi32, #tpu.memory_space<vmem>>, vector<1x1x512xi32>
    %13 = vector.shape_cast %12 : vector<1x1x512xi32> to vector<1x512xi32>
    %14 = tpu.iota {dimensions = array<i32: 0>} : vector<24x512xi32>
    %c24_i32 = arith.constant 24 : i32
    %15 = arith.muli %arg0, %c24_i32 : i32
    %16 = vector.broadcast %15 : i32 to vector<24x512xi32>
    %17 = arith.addi %14, %16 : vector<24x512xi32>
    %18 = vector.broadcast %13 : vector<1x512xi32> to vector<24x512xi32>
    %19 = arith.cmpi eq, %17, %18 : vector<24x512xi32>
    %20 = arith.extui %19 : vector<24x512xi1> to vector<24x512xi32>
    %21 = arith.sitofp %20 : vector<24x512xi32> to vector<24x512xf32>
    %22 = arith.truncf %21 : vector<24x512xf32> to vector<24x512xbf16>
    %c0_10 = arith.constant 0 : index
    %c0_11 = arith.constant 0 : index
    %23 = vector.load %arg12[%c0_10, %c0_11] : memref<24x128xf32, #tpu.memory_space<vmem>>, vector<24x128xf32>
    %cst_12 = arith.constant dense<0.000000e+00> : vector<24x128xf32>
    %24 = tpu.matmul %22, %11, %cst_12 {dimension_numbers = #tpu.dot_dimension_numbers<[1], [0], [0], [1], [0, 0, 1, 1], [], []>} : vector<24x512xbf16>, vector<512x128xbf16>, vector<24x128xf32> -> vector<24x128xf32>
    %25 = arith.addf %23, %24 : vector<24x128xf32>
    %c0_13 = arith.constant 0 : index
    %c0_14 = arith.constant 0 : index
    %26 = vector.load %arg12[%c0_13, %c0_14] : memref<24x128xf32, #tpu.memory_space<vmem>>, vector<24x128xf32>
    tpu.vector_store %arg12[%c0_13, %c0_14], %25 {strides = array<i32>} : memref<24x128xf32, #tpu.memory_space<vmem>>, vector<24x128xf32>,
    %c0_i32_15 = arith.constant 0 : i32
    %27 = arith.cmpi eq, %arg1, %c0_i32_15 : i32
    %28 = arith.extui %27 : i1 to i32
    %c0_i32_16 = arith.constant 0 : i32
    %29 = arith.cmpi ne, %28, %c0_i32_16 : i32
    scf.if %29 {
      %c0_17 = arith.constant 0 : index
      %c0_18 = arith.constant 0 : index
      %30 = vector.load %arg6[%c0_17, %c0_18] : memref<24x12xbf16, #tpu.memory_space<vmem>>, vector<24x12xbf16>
      %c0_19 = arith.constant 0 : index
      %c0_20 = arith.constant 0 : index
      %31 = vector.load %arg7[%c0_19, %c0_20] : memref<12x128xbf16, #tpu.memory_space<vmem>>, vector<12x128xbf16>
      %cst_21 = arith.constant dense<0.000000e+00> : vector<24x128xf32>
      %32 = tpu.matmul %30, %31, %cst_21 {dimension_numbers = #tpu.dot_dimension_numbers<[1], [0], [0], [1], [0, 0, 1, 1], [], []>} : vector<24x12xbf16>, vector<12x128xbf16>, vector<24x128xf32> -> vector<24x128xf32>
      %c0_22 = arith.constant 0 : index
      %c0_23 = arith.constant 0 : index
      %33 = vector.load %arg9[%c0_22, %c0_23] : memref<1x128xf32, #tpu.memory_space<vmem>>, vector<1x128xf32>
      %34 = vector.broadcast %33 : vector<1x128xf32> to vector<24x128xf32>
      %35 = arith.addf %32, %34 : vector<24x128xf32>
      %cst_24 = arith.constant 0.000000e+00 : f32
      %36 = vector.broadcast %cst_24 : f32 to vector<24x128xf32>
      %37 = arith.maximumf %35, %36 : vector<24x128xf32>
      %c0_25 = arith.constant 0 : index
      %c0_26 = arith.constant 0 : index
      %38 = vector.load %arg12[%c0_25, %c0_26] : memref<24x128xf32, #tpu.memory_space<vmem>>, vector<24x128xf32>
      %39 = arith.truncf %38 : vector<24x128xf32> to vector<24x128xbf16>
      %c0_27 = arith.constant 0 : index
      %c0_28 = arith.constant 0 : index
      %40 = vector.load %arg8[%c0_27, %c0_28] : memref<128x128xbf16, #tpu.memory_space<vmem>>, vector<128x128xbf16>
      %cst_29 = arith.constant dense<0.000000e+00> : vector<24x128xf32>
      %41 = tpu.matmul %39, %40, %cst_29 {dimension_numbers = #tpu.dot_dimension_numbers<[1], [0], [0], [1], [0, 0, 1, 1], [], []>} : vector<24x128xbf16>, vector<128x128xbf16>, vector<24x128xf32> -> vector<24x128xf32>
      %c0_30 = arith.constant 0 : index
      %c0_31 = arith.constant 0 : index
      %42 = vector.load %arg10[%c0_30, %c0_31] : memref<1x128xf32, #tpu.memory_space<vmem>>, vector<1x128xf32>
      %43 = vector.broadcast %42 : vector<1x128xf32> to vector<24x128xf32>
      %44 = arith.addf %41, %43 : vector<24x128xf32>
      %cst_32 = arith.constant 0.000000e+00 : f32
      %45 = vector.broadcast %cst_32 : f32 to vector<24x128xf32>
      %46 = arith.maximumf %44, %45 : vector<24x128xf32>
      %47 = arith.addf %37, %46 : vector<24x128xf32>
      %cst_33 = arith.constant 0.000000e+00 : f32
      %48 = vector.broadcast %cst_33 : f32 to vector<24x128xf32>
      %49 = arith.maximumf %47, %48 : vector<24x128xf32>
      %50 = arith.mulf %49, %49 : vector<24x128xf32>
      %cst_34 = arith.constant dense<0.000000e+00> : vector<24xf32>
      %51 = vector.multi_reduction <add>, %50, %cst_34 [1] : vector<24x128xf32> to vector<24xf32>
      %52 = vector.shape_cast %51 : vector<24xf32> to vector<24x1xf32>
      %cst_35 = arith.constant 0.000000e+00 : f32
      %53 = vector.broadcast %cst_35 : f32 to vector<24x1xf32>
      %54 = arith.cmpf ogt, %52, %53 : vector<24x1xf32>
      %55 = math.rsqrt %52 : vector<24x1xf32>
      %cst_36 = arith.constant 1.000000e+00 : f32
      %56 = vector.broadcast %cst_36 : f32 to vector<24x1xf32>
      %57 = arith.select %54, %55, %56 : vector<24x1xi1>, vector<24x1xf32>
      %58 = vector.broadcast %57 : vector<24x1xf32> to vector<24x128xf32>
      %59 = arith.mulf %49, %58 : vector<24x128xf32>
      %c0_37 = arith.constant 0 : index
      %c0_38 = arith.constant 0 : index
      %60 = vector.load %arg11[%c0_37, %c0_38] : memref<24x128xf32, #tpu.memory_space<vmem>>, vector<24x128xf32>
      tpu.vector_store %arg11[%c0_37, %c0_38], %59 {strides = array<i32>} : memref<24x128xf32, #tpu.memory_space<vmem>>, vector<24x128xf32>,
    } else {
    }
    return
  }
  func.func @transform_0(%arg0: i32, %arg1: i32) -> (i32, i32) {
    %c0_i32 = arith.constant 0 : i32
    %c0_i32_0 = arith.constant 0 : i32
    return %arg1, %c0_i32 : i32, i32
  }
  func.func @transform_1(%arg0: i32, %arg1: i32) -> (i32, i32) {
    %c0_i32 = arith.constant 0 : i32
    %c0_i32_0 = arith.constant 0 : i32
    return %arg1, %c0_i32 : i32, i32
  }
  func.func @transform_2(%arg0: i32, %arg1: i32) -> (i32, i32, i32) {
    %c0_i32 = arith.constant 0 : i32
    %c0_i32_0 = arith.constant 0 : i32
    %c0_i32_1 = arith.constant 0 : i32
    return %arg1, %c0_i32, %c0_i32_0 : i32, i32, i32
  }
  func.func @transform_3(%arg0: i32, %arg1: i32) -> (i32, i32) {
    %c0_i32 = arith.constant 0 : i32
    %c0_i32_0 = arith.constant 0 : i32
    %c0_i32_1 = arith.constant 0 : i32
    return %c0_i32, %c0_i32_0 : i32, i32
  }
  func.func @transform_4(%arg0: i32, %arg1: i32) -> (i32, i32) {
    %c0_i32 = arith.constant 0 : i32
    %c0_i32_0 = arith.constant 0 : i32
    return %arg0, %c0_i32 : i32, i32
  }
  func.func @transform_5(%arg0: i32, %arg1: i32) -> (i32, i32) {
    %c0_i32 = arith.constant 0 : i32
    %c0_i32_0 = arith.constant 0 : i32
    %c0_i32_1 = arith.constant 0 : i32
    return %c0_i32, %c0_i32_0 : i32, i32
  }
  func.func @transform_6(%arg0: i32, %arg1: i32) -> (i32, i32) {
    %c0_i32 = arith.constant 0 : i32
    %c0_i32_0 = arith.constant 0 : i32
    %c0_i32_1 = arith.constant 0 : i32
    return %c0_i32, %c0_i32_0 : i32, i32
  }
  func.func @transform_7(%arg0: i32, %arg1: i32) -> (i32, i32) {
    %c0_i32 = arith.constant 0 : i32
    %c0_i32_0 = arith.constant 0 : i32
    %c0_i32_1 = arith.constant 0 : i32
    return %c0_i32, %c0_i32_0 : i32, i32
  }
  func.func @transform_8(%arg0: i32, %arg1: i32) -> (i32, i32) {
    %c0_i32 = arith.constant 0 : i32
    %c0_i32_0 = arith.constant 0 : i32
    %c0_i32_1 = arith.constant 0 : i32
    return %c0_i32, %c0_i32_0 : i32, i32
  }
  func.func @transform_9(%arg0: i32, %arg1: i32) -> (i32, i32) {
    %c0_i32 = arith.constant 0 : i32
    %c0_i32_0 = arith.constant 0 : i32
    return %arg0, %c0_i32 : i32, i32
  }
}

</mosaic_0001>

<llo_original>
// kernel: tpu_custom_call.1
$region0: #{tpu_custom_call.1}
  #allocation0 [shape = 'u32[]', space=smem, size = 0x4, offset = 0x4, fixed_abs, tag = 'smem constant byte address 0x4 - core index']
  #allocation1 [shape = 'u32[144,128]{1,0:T(1,128)}', space=vmem, size = 0x12000, scoped, tag = 'internal scratch']
  #allocation2 [shape = 'f32[24,128]{1,0:T(8,128)}', space=vmem, size = 0x3000, scoped, tag = 'scratch operand']
  %s0 = inlined_call_operand.vmem [shape: bf16[512,8], index: 0, kind: input, shape index: {}]
  %s1 = inlined_call_operand.vmem [shape: bf16[512,128], index: 1, kind: input, shape index: {}]
  %s2 = inlined_call_operand.vmem [shape: s32[1,1,512], index: 2, kind: input, shape index: {}]
  %s3 = inlined_call_operand.vmem [shape: bf16[8,128], index: 3, kind: input, shape index: {}]
  %s4 = inlined_call_operand.vmem [shape: bf16[24,12], index: 4, kind: input, shape index: {}]
  %s5 = inlined_call_operand.vmem [shape: bf16[12,128], index: 5, kind: input, shape index: {}]
  %s6 = inlined_call_operand.hbm [shape: bf16[128,128], index: 6, kind: input, shape index: {}]
  %s7 = inlined_call_operand.vmem [shape: f32[1,128], index: 7, kind: input, shape index: {}]
  %s8 = inlined_call_operand.vmem [shape: f32[1,128], index: 8, kind: input, shape index: {}]
  %s9 = inlined_call_operand.hbm [shape: f32[24,128], index: 9, kind: output, shape index: {}]
  %s10 = sld [smem:[#allocation0]]
  $region58: #{tpu_custom_call.1} parent=0
    _
  %s12 = ssub.s32 1, %s10
  %s13 = scalar_select 0, %s12, %s10
  $region1: #{tpu_custom_call.1} parent=0
    #allocation3 [shape = 'u8[32768]{0}', space=vmem, size = 0x8000, scoped, tag = 'input window, operand 6, single buffered']
    #allocation4 [shape = 's32[1]{0}', space=sflag, size = 0x4, scoped, tag = 'scoped memory for tpu_custom_call.1']
    #allocation5 [shape = 's32[1]{0}', space=sflag, size = 0x4, scoped, tag = 'scoped memory for tpu_custom_call.1']
    #allocation6 [shape = 'u8[12288]{0}', space=vmem, size = 0x3000, scoped, tag = 'output window, operand 0, single buffered']
    %14 = vsyncpa [#allocation4], 0
    %15 = vsyncpa [#allocation5], 0
    // Predicated region
    $region2: #{tpu_custom_call.1} parent=1 // pred_check
      _
    $region3: #{tpu_custom_call.1} parent=1 // pred_check_branch
      %17 = sbr.rel (0) target = $region5
    $region4: #{tpu_custom_call.1} parent=1 // pred_region
      _
    $region5: #{tpu_custom_call.1} parent=1 // pred_fallthru
      _
    // Predicated region
    $region6: #{tpu_custom_call.1} parent=1 // pred_check
      _
    $region7: #{tpu_custom_call.1} parent=1 // pred_check_branch
      %19 = sbr.rel (0) target = $region9
    $region8: #{tpu_custom_call.1} parent=1 // pred_region
      _
    $region9: #{tpu_custom_call.1} parent=1 // pred_fallthru
      _
    // Predicated region
    $region10: #{tpu_custom_call.1} parent=1 // pred_check
      _
    $region11: #{tpu_custom_call.1} parent=1 // pred_check_branch
      %21 = sbr.rel (0) target = $region13
    $region12: #{tpu_custom_call.1} parent=1 // pred_region
      _
    $region13: #{tpu_custom_call.1} parent=1 // pred_fallthru
      _
    // Predicated region
    $region14: #{tpu_custom_call.1} parent=1 // pred_check
      _
    $region15: #{tpu_custom_call.1} parent=1 // pred_check_branch
      %23 = sbr.rel (0) target = $region17
    $region16: #{tpu_custom_call.1} parent=1 // pred_region
      _
    $region17: #{tpu_custom_call.1} parent=1 // pred_fallthru
      _
    // Predicated region
    $region18: #{tpu_custom_call.1} parent=1 // pred_check
      _
    $region19: #{tpu_custom_call.1} parent=1 // pred_check_branch
      %25 = sbr.rel (0) target = $region21
    $region20: #{tpu_custom_call.1} parent=1 // pred_region
      _
    $region21: #{tpu_custom_call.1} parent=1 // pred_fallthru
      _
    // Predicated region
    $region22: #{tpu_custom_call.1} parent=1 // pred_check
      _
    $region23: #{tpu_custom_call.1} parent=1 // pred_check_branch
      %27 = sbr.rel (0) target = $region25
    $region24: #{tpu_custom_call.1} parent=1 // pred_region
      _
    $region25: #{tpu_custom_call.1} parent=1 // pred_fallthru
      _
    // Predicated region
    $region26: #{tpu_custom_call.1} parent=1 // pred_check
      _
    $region27: #{tpu_custom_call.1} parent=1 // pred_check_branch
      %29 = sbr.rel (0) target = $region29
    $region28: #{tpu_custom_call.1} parent=1 // pred_region
      %s31 = ssub.s32 1024, 1024
      %32 = vsyncadd [#allocation4], %s31
      %s33 = sshll.u32 [#allocation3], 4
      %s34 = int_to_ptr.vmem [resolvable:$true] %s33
      %39 = dma.hbm_to_vmem [thread:$0]  %s6, 1024, %s34, [#allocation4], 64, 64, 4
    $region29: #{tpu_custom_call.1} parent=1 // pred_fallthru
      _
    // Predicated region
    $region30: #{tpu_custom_call.1} parent=1 // pred_check
      _
    $region31: #{tpu_custom_call.1} parent=1 // pred_check_branch
      %41 = sbr.rel (0) target = $region33
    $region32: #{tpu_custom_call.1} parent=1 // pred_region
      _
    $region33: #{tpu_custom_call.1} parent=1 // pred_fallthru
      _
    // Predicated region
    $region34: #{tpu_custom_call.1} parent=1 // pred_check
      _
    $region35: #{tpu_custom_call.1} parent=1 // pred_check_branch
      %43 = sbr.rel (0) target = $region37
    $region36: #{tpu_custom_call.1} parent=1 // pred_region
      _
    $region37: #{tpu_custom_call.1} parent=1 // pred_fallthru
      _
    // Predicated region
    $region38: #{tpu_custom_call.1} parent=1 // pred_check
      _
    $region39: #{tpu_custom_call.1} parent=1 // pred_check_branch
      %45 = sbr.rel (0) target = $region41
    $region40: #{tpu_custom_call.1} parent=1 // pred_region
      %46 = dma.done [#allocation4], 1024
    $region41: #{tpu_custom_call.1} parent=1 // pred_fallthru
      _
    %p48 = scmp.eq.s32.totalorder 0, 0
    // Predicated region
    $region42: #{tpu_custom_call.1} parent=1 // pred_check
      %p49 = pneg %p48
    $region43: #{tpu_custom_call.1} parent=1 // pred_check_branch
      %51 = sbr.rel (%p49) target = $region45
    $region44: #{tpu_custom_call.1} parent=1 // pred_region
      %52 = vst [vmem:[#allocation2] sm:$0xff] 0.0
      %53 = vst [vmem:[#allocation2 + $0x8] sm:$0xff] 0.0
      %54 = vst [vmem:[#allocation2 + $0x10] sm:$0xff] 0.0
      %55 = vst [vmem:[#allocation6] sm:$0xff] 0.0
      %56 = vst [vmem:[#allocation6 + $0x8] sm:$0xff] 0.0
      %57 = vst [vmem:[#allocation6 + $0x10] sm:$0xff] 0.0
    $region45: #{tpu_custom_call.1} parent=1 // pred_fallthru
      _
    %v58 = vld [vmem:[%s0] sm:$0xf]
    %v59 = vld [vmem:[%s0 + $0x4] sm:$0xf]
    %v60 = vld [vmem:[%s0 + $0x8] sm:$0xf]
    %v61 = vld [vmem:[%s0 + $0xc] sm:$0xf]
    %v62 = vld [vmem:[%s0 + $0x10] sm:$0xf]
    %v63 = vld [vmem:[%s0 + $0x14] sm:$0xf]
    %v64 = vld [vmem:[%s0 + $0x18] sm:$0xf]
    %v65 = vld [vmem:[%s0 + $0x1c] sm:$0xf]
    %v66 = vld [vmem:[%s0 + $0x20] sm:$0xf]
    %v67 = vld [vmem:[%s0 + $0x24] sm:$0xf]
    %v68 = vld [vmem:[%s0 + $0x28] sm:$0xf]
    %v69 = vld [vmem:[%s0 + $0x2c] sm:$0xf]
    %v70 = vld [vmem:[%s0 + $0x30] sm:$0xf]
    %v71 = vld [vmem:[%s0 + $0x34] sm:$0xf]
    %v72 = vld [vmem:[%s0 + $0x38] sm:$0xf]
    %v73 = vld [vmem:[%s0 + $0x3c] sm:$0xf]
    %v74 = vld [vmem:[%s0 + $0x40] sm:$0xf]
    %v75 = vld [vmem:[%s0 + $0x44] sm:$0xf]
    %v76 = vld [vmem:[%s0 + $0x48] sm:$0xf]
    %v77 = vld [vmem:[%s0 + $0x4c] sm:$0xf]
    %v78 = vld [vmem:[%s0 + $0x50] sm:$0xf]
    %v79 = vld [vmem:[%s0 + $0x54] sm:$0xf]
    %v80 = vld [vmem:[%s0 + $0x58] sm:$0xf]
    %v81 = vld [vmem:[%s0 + $0x5c] sm:$0xf]
    %v82 = vld [vmem:[%s0 + $0x60] sm:$0xf]
    %v83 = vld [vmem:[%s0 + $0x64] sm:$0xf]
    %v84 = vld [vmem:[%s0 + $0x68] sm:$0xf]
    %v85 = vld [vmem:[%s0 + $0x6c] sm:$0xf]
    %v86 = vld [vmem:[%s0 + $0x70] sm:$0xf]
    %v87 = vld [vmem:[%s0 + $0x74] sm:$0xf]
    %v88 = vld [vmem:[%s0 + $0x78] sm:$0xf]
    %v89 = vld [vmem:[%s0 + $0x7c] sm:$0xf]
    %v90 = vld [vmem:[%s0 + $0x80] sm:$0xf]
    %v91 = vld [vmem:[%s0 + $0x84] sm:$0xf]
    %v92 = vld [vmem:[%s0 + $0x88] sm:$0xf]
    %v93 = vld [vmem:[%s0 + $0x8c] sm:$0xf]
    %v94 = vld [vmem:[%s0 + $0x90] sm:$0xf]
    %v95 = vld [vmem:[%s0 + $0x94] sm:$0xf]
    %v96 = vld [vmem:[%s0 + $0x98] sm:$0xf]
    %v97 = vld [vmem:[%s0 + $0x9c] sm:$0xf]
    %v98 = vld [vmem:[%s0 + $0xa0] sm:$0xf]
    %v99 = vld [vmem:[%s0 + $0xa4] sm:$0xf]
    %v100 = vld [vmem:[%s0 + $0xa8] sm:$0xf]
    %v101 = vld [vmem:[%s0 + $0xac] sm:$0xf]
    %v102 = vld [vmem:[%s0 + $0xb0] sm:$0xf]
    %v103 = vld [vmem:[%s0 + $0xb4] sm:$0xf]
    %v104 = vld [vmem:[%s0 + $0xb8] sm:$0xf]
    %v105 = vld [vmem:[%s0 + $0xbc] sm:$0xf]
    %v106 = vld [vmem:[%s0 + $0xc0] sm:$0xf]
    %v107 = vld [vmem:[%s0 + $0xc4] sm:$0xf]
    %v108 = vld [vmem:[%s0 + $0xc8] sm:$0xf]
    %v109 = vld [vmem:[%s0 + $0xcc] sm:$0xf]
    %v110 = vld [vmem:[%s0 + $0xd0] sm:$0xf]
    %v111 = vld [vmem:[%s0 + $0xd4] sm:$0xf]
    %v112 = vld [vmem:[%s0 + $0xd8] sm:$0xf]
    %v113 = vld [vmem:[%s0 + $0xdc] sm:$0xf]
    %v114 = vld [vmem:[%s0 + $0xe0] sm:$0xf]
    %v115 = vld [vmem:[%s0 + $0xe4] sm:$0xf]
    %v116 = vld [vmem:[%s0 + $0xe8] sm:$0xf]
    %v117 = vld [vmem:[%s0 + $0xec] sm:$0xf]
    %v118 = vld [vmem:[%s0 + $0xf0] sm:$0xf]
    %v119 = vld [vmem:[%s0 + $0xf4] sm:$0xf]
    %v120 = vld [vmem:[%s0 + $0xf8] sm:$0xf]
    %v121 = vld [vmem:[%s0 + $0xfc] sm:$0xf]
    %v122 = vld [vmem:[%s3] sm:$0xf]
    %v187 = vunpack.c.l.b16 %v58
    %v188 = vunpack.c.l.b16 %v59
    %v189 = vunpack.c.l.b16 %v60
    %v190 = vunpack.c.l.b16 %v61
    %v191 = vunpack.c.l.b16 %v62
    %v192 = vunpack.c.l.b16 %v63
    %v193 = vunpack.c.l.b16 %v64
    %v194 = vunpack.c.l.b16 %v65
    %v195 = vunpack.c.l.b16 %v66
    %v196 = vunpack.c.l.b16 %v67
    %v197 = vunpack.c.l.b16 %v68
    %v198 = vunpack.c.l.b16 %v69
    %v199 = vunpack.c.l.b16 %v70
    %v200 = vunpack.c.l.b16 %v71
    %v201 = vunpack.c.l.b16 %v72
    %v202 = vunpack.c.l.b16 %v73
    %v203 = vunpack.c.l.b16 %v74
    %v204 = vunpack.c.l.b16 %v75
    %v205 = vunpack.c.l.b16 %v76
    %v206 = vunpack.c.l.b16 %v77
    %v207 = vunpack.c.l.b16 %v78
    %v208 = vunpack.c.l.b16 %v79
    %v209 = vunpack.c.l.b16 %v80
    %v210 = vunpack.c.l.b16 %v81
    %v211 = vunpack.c.l.b16 %v82
    %v212 = vunpack.c.l.b16 %v83
    %v213 = vunpack.c.l.b16 %v84
    %v214 = vunpack.c.l.b16 %v85
    %v215 = vunpack.c.l.b16 %v86
    %v216 = vunpack.c.l.b16 %v87
    %v217 = vunpack.c.l.b16 %v88
    %v218 = vunpack.c.l.b16 %v89
    %v219 = vunpack.c.l.b16 %v90
    %v220 = vunpack.c.l.b16 %v91
    %v221 = vunpack.c.l.b16 %v92
    %v222 = vunpack.c.l.b16 %v93
    %v223 = vunpack.c.l.b16 %v94
    %v224 = vunpack.c.l.b16 %v95
    %v225 = vunpack.c.l.b16 %v96
    %v226 = vunpack.c.l.b16 %v97
    %v227 = vunpack.c.l.b16 %v98
    %v228 = vunpack.c.l.b16 %v99
    %v229 = vunpack.c.l.b16 %v100
    %v230 = vunpack.c.l.b16 %v101
    %v231 = vunpack.c.l.b16 %v102
    %v232 = vunpack.c.l.b16 %v103
    %v233 = vunpack.c.l.b16 %v104
    %v234 = vunpack.c.l.b16 %v105
    %v235 = vunpack.c.l.b16 %v106
    %v236 = vunpack.c.l.b16 %v107
    %v237 = vunpack.c.l.b16 %v108
    %v238 = vunpack.c.l.b16 %v109
    %v239 = vunpack.c.l.b16 %v110
    %v240 = vunpack.c.l.b16 %v111
    %v241 = vunpack.c.l.b16 %v112
    %v242 = vunpack.c.l.b16 %v113
    %v243 = vunpack.c.l.b16 %v114
    %v244 = vunpack.c.l.b16 %v115
    %v245 = vunpack.c.l.b16 %v116
    %v246 = vunpack.c.l.b16 %v117
    %v247 = vunpack.c.l.b16 %v118
    %v248 = vunpack.c.l.b16 %v119
    %v249 = vunpack.c.l.b16 %v120
    %v250 = vunpack.c.l.b16 %v121
    %v251 = vpack.c.b16 %v188, %v187
    %v252 = vpack.c.b16 %v190, %v189
    %v253 = vpack.c.b16 %v192, %v191
    %v254 = vpack.c.b16 %v194, %v193
    %v255 = vpack.c.b16 %v196, %v195
    %v256 = vpack.c.b16 %v198, %v197
    %v257 = vpack.c.b16 %v200, %v199
    %v258 = vpack.c.b16 %v202, %v201
    %v259 = vpack.c.b16 %v204, %v203
    %v260 = vpack.c.b16 %v206, %v205
    %v261 = vpack.c.b16 %v208, %v207
    %v262 = vpack.c.b16 %v210, %v209
    %v263 = vpack.c.b16 %v212, %v211
    %v264 = vpack.c.b16 %v214, %v213
    %v265 = vpack.c.b16 %v216, %v215
    %v266 = vpack.c.b16 %v218, %v217
    %v267 = vpack.c.b16 %v220, %v219
    %v268 = vpack.c.b16 %v222, %v221
    %v269 = vpack.c.b16 %v224, %v223
    %v270 = vpack.c.b16 %v226, %v225
    %v271 = vpack.c.b16 %v228, %v227
    %v272 = vpack.c.b16 %v230, %v229
    %v273 = vpack.c.b16 %v232, %v231
    %v274 = vpack.c.b16 %v234, %v233
    %v275 = vpack.c.b16 %v236, %v235
    %v276 = vpack.c.b16 %v238, %v237
    %v277 = vpack.c.b16 %v240, %v239
    %v278 = vpack.c.b16 %v242, %v241
    %v279 = vpack.c.b16 %v244, %v243
    %v280 = vpack.c.b16 %v246, %v245
    %v281 = vpack.c.b16 %v248, %v247
    %v282 = vpack.c.b16 %v250, %v249
    %vm283 = vcmask 64512
    %v285 = vsel %vm283, %v251, 0
    %v288 = vsel %vm283, %v252, 0
    %v291 = vsel %vm283, %v253, 0
    %v294 = vsel %vm283, %v254, 0
    %v297 = vsel %vm283, %v255, 0
    %v300 = vsel %vm283, %v256, 0
    %v303 = vsel %vm283, %v257, 0
    %v306 = vsel %vm283, %v258, 0
    %v309 = vsel %vm283, %v259, 0
    %v312 = vsel %vm283, %v260, 0
    %v315 = vsel %vm283, %v261, 0
    %v318 = vsel %vm283, %v262, 0
    %v321 = vsel %vm283, %v263, 0
    %v324 = vsel %vm283, %v264, 0
    %v327 = vsel %vm283, %v265, 0
    %v330 = vsel %vm283, %v266, 0
    %v333 = vsel %vm283, %v267, 0
    %v336 = vsel %vm283, %v268, 0
    %v339 = vsel %vm283, %v269, 0
    %v342 = vsel %vm283, %v270, 0
    %v345 = vsel %vm283, %v271, 0
    %v348 = vsel %vm283, %v272, 0
    %v351 = vsel %vm283, %v273, 0
    %v354 = vsel %vm283, %v274, 0
    %v357 = vsel %vm283, %v275, 0
    %v360 = vsel %vm283, %v276, 0
    %v363 = vsel %vm283, %v277, 0
    %v366 = vsel %vm283, %v278, 0
    %v369 = vsel %vm283, %v279, 0
    %v372 = vsel %vm283, %v280, 0
    %v375 = vsel %vm283, %v281, 0
    %v378 = vsel %vm283, %v282, 0
    %vm380 = vcmask 1043456
    %v382 = vsel %vm380, %v122, 0
    %384 = vmatprep.subr.bf16.mxu0 0
    %385 = vmatpush1.bf16.msra.mxu0 %v382
    %386 = vmatprep.subr.bf16.mxu0 0
    %387 = vmatpush1.bf16.msra.mxu0 0
    %388 = vmatprep.subr.bf16.mxu0 0
    %389 = vmatpush1.bf16.msra.mxu0 0
    %390 = vmatprep.subr.bf16.mxu0 0
    %391 = vmatpush1.bf16.msra.mxu0 0
    %392 = vmatprep.subr.bf16.mxu0 0
    %393 = vmatpush1.bf16.msra.mxu0 0
    %394 = vmatprep.subr.bf16.mxu0 0
    %395 = vmatpush1.bf16.msra.mxu0 0
    %396 = vmatprep.subr.bf16.mxu0 0
    %397 = vmatpush1.bf16.msra.mxu0 0
    %398 = vmatprep.subr.bf16.mxu0 0
    %399 = vmatpush1.bf16.msra.mxu0 0
    %400 = vmatprep.subr.bf16.mxu0 0
    %401 = vmatpush1.bf16.msra.mxu0 0
    %402 = vmatprep.subr.bf16.mxu0 0
    %403 = vmatpush1.bf16.msra.mxu0 0
    %404 = vmatprep.subr.bf16.mxu0 0
    %405 = vmatpush1.bf16.msra.mxu0 0
    %406 = vmatprep.subr.bf16.mxu0 0
    %407 = vmatpush1.bf16.msra.mxu0 0
    %408 = vmatprep.subr.bf16.mxu0 0
    %409 = vmatpush1.bf16.msra.mxu0 0
    %410 = vmatprep.subr.bf16.mxu0 0
    %411 = vmatpush1.bf16.msra.mxu0 0
    %412 = vmatprep.subr.bf16.mxu0 0
    %413 = vmatpush1.bf16.msra.mxu0 0
    %414 = vmatprep.subr.bf16.mxu0 0
    %415 = vmatpush1.bf16.msra.mxu0 0
    %416 = vmatprep.mubr.bf16.mxu0 0
    %417 = vmatmul.mubr.bf16.gmra.mrb[0].mxu0 %v285
    %v418 = vpop.f32.mrb[0].mxu0
    %v419 = vadd.f32 0.0, %v418
    %v420 = vpop.f32.mrb[0].mxu0
    %v421 = vpop.f32.mrb[0].mxu0
    %v422 = vadd.f32 0.0, %v421
    %v423 = vpop.f32.mrb[0].mxu0
    %424 = vmatprep.mubr.bf16.mxu0 0
    %425 = vmatmul.mubr.bf16.gmra.mrb[0].mxu0 %v288
    %v426 = vpop.f32.mrb[0].mxu0
    %v427 = vadd.f32 0.0, %v426
    %v428 = vpop.f32.mrb[0].mxu0
    %v429 = vpop.f32.mrb[0].mxu0
    %v430 = vadd.f32 0.0, %v429
    %v431 = vpop.f32.mrb[0].mxu0
    %432 = vmatprep.mubr.bf16.mxu0 0
    %433 = vmatmul.mubr.bf16.gmra.mrb[0].mxu0 %v291
    %v434 = vpop.f32.mrb[0].mxu0
    %v435 = vadd.f32 0.0, %v434
    %v436 = vpop.f32.mrb[0].mxu0
    %v437 = vpop.f32.mrb[0].mxu0
    %v438 = vadd.f32 0.0, %v437
    %v439 = vpop.f32.mrb[0].mxu0
    %440 = vmatprep.mubr.bf16.mxu0 0
    %441 = vmatmul.mubr.bf16.gmra.mrb[0].mxu0 %v294
    %v442 = vpop.f32.mrb[0].mxu0
    %v443 = vadd.f32 0.0, %v442
    %v444 = vpop.f32.mrb[0].mxu0
    %v445 = vpop.f32.mrb[0].mxu0
    %v446 = vadd.f32 0.0, %v445
    %v447 = vpop.f32.mrb[0].mxu0
    %448 = vmatprep.mubr.bf16.mxu0 0
    %449 = vmatmul.mubr.bf16.gmra.mrb[0].mxu0 %v297
    %v450 = vpop.f32.mrb[0].mxu0
    %v451 = vadd.f32 0.0, %v450
    %v452 = vpop.f32.mrb[0].mxu0
    %v453 = vpop.f32.mrb[0].mxu0
    %v454 = vadd.f32 0.0, %v453
    %v455 = vpop.f32.mrb[0].mxu0
    %456 = vmatprep.mubr.bf16.mxu0 0
    %457 = vmatmul.mubr.bf16.gmra.mrb[0].mxu0 %v300
    %v458 = vpop.f32.mrb[0].mxu0
    %v459 = vadd.f32 0.0, %v458
    %v460 = vpop.f32.mrb[0].mxu0
    %v461 = vpop.f32.mrb[0].mxu0
    %v462 = vadd.f32 0.0, %v461
    %v463 = vpop.f32.mrb[0].mxu0
    %464 = vmatprep.mubr.bf16.mxu0 0
    %465 = vmatmul.mubr.bf16.gmra.mrb[0].mxu0 %v303
    %v466 = vpop.f32.mrb[0].mxu0
    %v467 = vadd.f32 0.0, %v466
    %v468 = vpop.f32.mrb[0].mxu0
    %v469 = vpop.f32.mrb[0].mxu0
    %v470 = vadd.f32 0.0, %v469
    %v471 = vpop.f32.mrb[0].mxu0
    %472 = vmatprep.mubr.bf16.mxu0 0
    %473 = vmatmul.mubr.bf16.gmra.mrb[0].mxu0 %v306
    %v474 = vpop.f32.mrb[0].mxu0
    %v475 = vadd.f32 0.0, %v474
    %v476 = vpop.f32.mrb[0].mxu0
    %v477 = vpop.f32.mrb[0].mxu0
    %v478 = vadd.f32 0.0, %v477
    %v479 = vpop.f32.mrb[0].mxu0
    %480 = vmatprep.mubr.bf16.mxu0 0
    %481 = vmatmul.mubr.bf16.gmra.mrb[0].mxu0 %v309
    %v482 = vpop.f32.mrb[0].mxu0
    %v483 = vadd.f32 0.0, %v482
    %v484 = vpop.f32.mrb[0].mxu0
    %v485 = vpop.f32.mrb[0].mxu0
    %v486 = vadd.f32 0.0, %v485
    %v487 = vpop.f32.mrb[0].mxu0
    %488 = vmatprep.mubr.bf16.mxu0 0
    %489 = vmatmul.mubr.bf16.gmra.mrb[0].mxu0 %v312
    %v490 = vpop.f32.mrb[0].mxu0
    %v491 = vadd.f32 0.0, %v490
    %v492 = vpop.f32.mrb[0].mxu0
    %v493 = vpop.f32.mrb[0].mxu0
    %v494 = vadd.f32 0.0, %v493
    %v495 = vpop.f32.mrb[0].mxu0
    %496 = vmatprep.mubr.bf16.mxu0 0
    %497 = vmatmul.mubr.bf16.gmra.mrb[0].mxu0 %v315
    %v498 = vpop.f32.mrb[0].mxu0
    %v499 = vadd.f32 0.0, %v498
    %v500 = vpop.f32.mrb[0].mxu0
    %v501 = vpop.f32.mrb[0].mxu0
    %v502 = vadd.f32 0.0, %v501
    %v503 = vpop.f32.mrb[0].mxu0
    %504 = vmatprep.mubr.bf16.mxu0 0
    %505 = vmatmul.mubr.bf16.gmra.mrb[0].mxu0 %v318
    %v506 = vpop.f32.mrb[0].mxu0
    %v507 = vadd.f32 0.0, %v506
    %v508 = vpop.f32.mrb[0].mxu0
    %v509 = vpop.f32.mrb[0].mxu0
    %v510 = vadd.f32 0.0, %v509
    %v511 = vpop.f32.mrb[0].mxu0
    %512 = vmatprep.mubr.bf16.mxu0 0
    %513 = vmatmul.mubr.bf16.gmra.mrb[0].mxu0 %v321
    %v514 = vpop.f32.mrb[0].mxu0
    %v515 = vadd.f32 0.0, %v514
    %v516 = vpop.f32.mrb[0].mxu0
    %v517 = vpop.f32.mrb[0].mxu0
    %v518 = vadd.f32 0.0, %v517
    %v519 = vpop.f32.mrb[0].mxu0
    %520 = vmatprep.mubr.bf16.mxu0 0
    %521 = vmatmul.mubr.bf16.gmra.mrb[0].mxu0 %v324
    %v522 = vpop.f32.mrb[0].mxu0
    %v523 = vadd.f32 0.0, %v522
    %v524 = vpop.f32.mrb[0].mxu0
    %v525 = vpop.f32.mrb[0].mxu0
    %v526 = vadd.f32 0.0, %v525
    %v527 = vpop.f32.mrb[0].mxu0
    %528 = vmatprep.mubr.bf16.mxu0 0
    %529 = vmatmul.mubr.bf16.gmra.mrb[0].mxu0 %v327
    %v530 = vpop.f32.mrb[0].mxu0
    %v531 = vadd.f32 0.0, %v530
    %v532 = vpop.f32.mrb[0].mxu0
    %v533 = vpop.f32.mrb[0].mxu0
    %v534 = vadd.f32 0.0, %v533
    %v535 = vpop.f32.mrb[0].mxu0
    %536 = vmatprep.mubr.bf16.mxu0 0
    %537 = vmatmul.mubr.bf16.gmra.mrb[0].mxu0 %v330
    %v538 = vpop.f32.mrb[0].mxu0
    %v539 = vadd.f32 0.0, %v538
    %v540 = vpop.f32.mrb[0].mxu0
    %v541 = vpop.f32.mrb[0].mxu0
    %v542 = vadd.f32 0.0, %v541
    %v543 = vpop.f32.mrb[0].mxu0
    %544 = vmatprep.mubr.bf16.mxu0 0
    %545 = vmatmul.mubr.bf16.gmra.mrb[0].mxu0 %v333
    %v546 = vpop.f32.mrb[0].mxu0
    %v547 = vadd.f32 0.0, %v546
    %v548 = vpop.f32.mrb[0].mxu0
    %v549 = vpop.f32.mrb[0].mxu0
    %v550 = vadd.f32 0.0, %v549
    %v551 = vpop.f32.mrb[0].mxu0
    %552 = vmatprep.mubr.bf16.mxu0 0
    %553 = vmatmul.mubr.bf16.gmra.mrb[0].mxu0 %v336
    %v554 = vpop.f32.mrb[0].mxu0
    %v555 = vadd.f32 0.0, %v554
    %v556 = vpop.f32.mrb[0].mxu0
    %v557 = vpop.f32.mrb[0].mxu0
    %v558 = vadd.f32 0.0, %v557
    %v559 = vpop.f32.mrb[0].mxu0
    %560 = vmatprep.mubr.bf16.mxu0 0
    %561 = vmatmul.mubr.bf16.gmra.mrb[0].mxu0 %v339
    %v562 = vpop.f32.mrb[0].mxu0
    %v563 = vadd.f32 0.0, %v562
    %v564 = vpop.f32.mrb[0].mxu0
    %v565 = vpop.f32.mrb[0].mxu0
    %v566 = vadd.f32 0.0, %v565
    %v567 = vpop.f32.mrb[0].mxu0
    %568 = vmatprep.mubr.bf16.mxu0 0
    %569 = vmatmul.mubr.bf16.gmra.mrb[0].mxu0 %v342
    %v570 = vpop.f32.mrb[0].mxu0
    %v571 = vadd.f32 0.0, %v570
    %v572 = vpop.f32.mrb[0].mxu0
    %v573 = vpop.f32.mrb[0].mxu0
    %v574 = vadd.f32 0.0, %v573
    %v575 = vpop.f32.mrb[0].mxu0
    %576 = vmatprep.mubr.bf16.mxu0 0
    %577 = vmatmul.mubr.bf16.gmra.mrb[0].mxu0 %v345
    %v578 = vpop.f32.mrb[0].mxu0
    %v579 = vadd.f32 0.0, %v578
    %v580 = vpop.f32.mrb[0].mxu0
    %v581 = vpop.f32.mrb[0].mxu0
    %v582 = vadd.f32 0.0, %v581
    %v583 = vpop.f32.mrb[0].mxu0
    %584 = vmatprep.mubr.bf16.mxu0 0
    %585 = vmatmul.mubr.bf16.gmra.mrb[0].mxu0 %v348
    %v586 = vpop.f32.mrb[0].mxu0
    %v587 = vadd.f32 0.0, %v586
    %v588 = vpop.f32.mrb[0].mxu0
    %v589 = vpop.f32.mrb[0].mxu0
    %v590 = vadd.f32 0.0, %v589
    %v591 = vpop.f32.mrb[0].mxu0
    %592 = vmatprep.mubr.bf16.mxu0 0
    %593 = vmatmul.mubr.bf16.gmra.mrb[0].mxu0 %v351
    %v594 = vpop.f32.mrb[0].mxu0
    %v595 = vadd.f32 0.0, %v594
    %v596 = vpop.f32.mrb[0].mxu0
    %v597 = vpop.f32.mrb[0].mxu0
    %v598 = vadd.f32 0.0, %v597
    %v599 = vpop.f32.mrb[0].mxu0
    %600 = vmatprep.mubr.bf16.mxu0 0
    %601 = vmatmul.mubr.bf16.gmra.mrb[0].mxu0 %v354
    %v602 = vpop.f32.mrb[0].mxu0
    %v603 = vadd.f32 0.0, %v602
    %v604 = vpop.f32.mrb[0].mxu0
    %v605 = vpop.f32.mrb[0].mxu0
    %v606 = vadd.f32 0.0, %v605
    %v607 = vpop.f32.mrb[0].mxu0
    %608 = vmatprep.mubr.bf16.mxu0 0
    %609 = vmatmul.mubr.bf16.gmra.mrb[0].mxu0 %v357
    %v610 = vpop.f32.mrb[0].mxu0
    %v611 = vadd.f32 0.0, %v610
    %v612 = vpop.f32.mrb[0].mxu0
    %v613 = vpop.f32.mrb[0].mxu0
    %v614 = vadd.f32 0.0, %v613
    %v615 = vpop.f32.mrb[0].mxu0
    %616 = vmatprep.mubr.bf16.mxu0 0
    %617 = vmatmul.mubr.bf16.gmra.mrb[0].mxu0 %v360
    %v618 = vpop.f32.mrb[0].mxu0
    %v619 = vadd.f32 0.0, %v618
    %v620 = vpop.f32.mrb[0].mxu0
    %v621 = vpop.f32.mrb[0].mxu0
    %v622 = vadd.f32 0.0, %v621
    %v623 = vpop.f32.mrb[0].mxu0
    %624 = vmatprep.mubr.bf16.mxu0 0
    %625 = vmatmul.mubr.bf16.gmra.mrb[0].mxu0 %v363
    %v626 = vpop.f32.mrb[0].mxu0
    %v627 = vadd.f32 0.0, %v626
    %v628 = vpop.f32.mrb[0].mxu0
    %v629 = vpop.f32.mrb[0].mxu0
    %v630 = vadd.f32 0.0, %v629
    %v631 = vpop.f32.mrb[0].mxu0
    %632 = vmatprep.mubr.bf16.mxu0 0
    %633 = vmatmul.mubr.bf16.gmra.mrb[0].mxu0 %v366
    %v634 = vpop.f32.mrb[0].mxu0
    %v635 = vadd.f32 0.0, %v634
    %v636 = vpop.f32.mrb[0].mxu0
    %v637 = vpop.f32.mrb[0].mxu0
    %v638 = vadd.f32 0.0, %v637
    %v639 = vpop.f32.mrb[0].mxu0
    %640 = vmatprep.mubr.bf16.mxu0 0
    %641 = vmatmul.mubr.bf16.gmra.mrb[0].mxu0 %v369
    %v642 = vpop.f32.mrb[0].mxu0
    %v643 = vadd.f32 0.0, %v642
    %v644 = vpop.f32.mrb[0].mxu0
    %v645 = vpop.f32.mrb[0].mxu0
    %v646 = vadd.f32 0.0, %v645
    %v647 = vpop.f32.mrb[0].mxu0
    %648 = vmatprep.mubr.bf16.mxu0 0
    %649 = vmatmul.mubr.bf16.gmra.mrb[0].mxu0 %v372
    %v650 = vpop.f32.mrb[0].mxu0
    %v651 = vadd.f32 0.0, %v650
    %v652 = vpop.f32.mrb[0].mxu0
    %v653 = vpop.f32.mrb[0].mxu0
    %v654 = vadd.f32 0.0, %v653
    %v655 = vpop.f32.mrb[0].mxu0
    %656 = vmatprep.mubr.bf16.mxu0 0
    %657 = vmatmul.mubr.bf16.gmra.mrb[0].mxu0 %v375
    %v658 = vpop.f32.mrb[0].mxu0
    %v659 = vadd.f32 0.0, %v658
    %v660 = vpop.f32.mrb[0].mxu0
    %v661 = vpop.f32.mrb[0].mxu0
    %v662 = vadd.f32 0.0, %v661
    %v663 = vpop.f32.mrb[0].mxu0
    %664 = vmatprep.mubr.bf16.mxu0 0
    %665 = vmatmul.mubr.bf16.gmra.mrb[0].mxu0 %v378
    %v666 = vpop.f32.mrb[0].mxu0
    %v667 = vadd.f32 0.0, %v666
    %v668 = vpop.f32.mrb[0].mxu0
    %v669 = vpop.f32.mrb[0].mxu0
    %v670 = vadd.f32 0.0, %v669
    %v671 = vpop.f32.mrb[0].mxu0
    %672 = vdwg.mxu0
    %v673 = vmax.f32 %v419, 0.0
    %v674 = vmax.f32 %v422, 0.0
    %v675 = vmax.f32 %v427, 0.0
    %v676 = vmax.f32 %v430, 0.0
    %v677 = vmax.f32 %v435, 0.0
    %v678 = vmax.f32 %v438, 0.0
    %v679 = vmax.f32 %v443, 0.0
    %v680 = vmax.f32 %v446, 0.0
    %v681 = vmax.f32 %v451, 0.0
    %v682 = vmax.f32 %v454, 0.0
    %v683 = vmax.f32 %v459, 0.0
    %v684 = vmax.f32 %v462, 0.0
    %v685 = vmax.f32 %v467, 0.0
    %v686 = vmax.f32 %v470, 0.0
    %v687 = vmax.f32 %v475, 0.0
    %v688 = vmax.f32 %v478, 0.0
    %v689 = vmax.f32 %v483, 0.0
    %v690 = vmax.f32 %v486, 0.0
    %v691 = vmax.f32 %v491, 0.0
    %v692 = vmax.f32 %v494, 0.0
    %v693 = vmax.f32 %v499, 0.0
    %v694 = vmax.f32 %v502, 0.0
    %v695 = vmax.f32 %v507, 0.0
    %v696 = vmax.f32 %v510, 0.0
    %v697 = vmax.f32 %v515, 0.0
    %v698 = vmax.f32 %v518, 0.0
    %v699 = vmax.f32 %v523, 0.0
    %v700 = vmax.f32 %v526, 0.0
    %v701 = vmax.f32 %v531, 0.0
    %v702 = vmax.f32 %v534, 0.0
    %v703 = vmax.f32 %v539, 0.0
    %v704 = vmax.f32 %v542, 0.0
    %v705 = vmax.f32 %v547, 0.0
    %v706 = vmax.f32 %v550, 0.0
    %v707 = vmax.f32 %v555, 0.0
    %v708 = vmax.f32 %v558, 0.0
    %v709 = vmax.f32 %v563, 0.0
    %v710 = vmax.f32 %v566, 0.0
    %v711 = vmax.f32 %v571, 0.0
    %v712 = vmax.f32 %v574, 0.0
    %v713 = vmax.f32 %v579, 0.0
    %v714 = vmax.f32 %v582, 0.0
    %v715 = vmax.f32 %v587, 0.0
    %v716 = vmax.f32 %v590, 0.0
    %v717 = vmax.f32 %v595, 0.0
    %v718 = vmax.f32 %v598, 0.0
    %v719 = vmax.f32 %v603, 0.0
    %v720 = vmax.f32 %v606, 0.0
    %v721 = vmax.f32 %v611, 0.0
    %v722 = vmax.f32 %v614, 0.0
    %v723 = vmax.f32 %v619, 0.0
    %v724 = vmax.f32 %v622, 0.0
    %v725 = vmax.f32 %v627, 0.0
    %v726 = vmax.f32 %v630, 0.0
    %v727 = vmax.f32 %v635, 0.0
    %v728 = vmax.f32 %v638, 0.0
    %v729 = vmax.f32 %v643, 0.0
    %v730 = vmax.f32 %v646, 0.0
    %v731 = vmax.f32 %v651, 0.0
    %v732 = vmax.f32 %v654, 0.0
    %v733 = vmax.f32 %v659, 0.0
    %v734 = vmax.f32 %v662, 0.0
    %v735 = vmax.f32 %v667, 0.0
    %v736 = vmax.f32 %v670, 0.0
    %v737 = vld [vmem:[%s1] sm:$0xf]
    %v738 = vld [vmem:[%s1 + $0x4] sm:$0xf]
    %v739 = vld [vmem:[%s1 + $0x8] sm:$0xf]
    %v740 = vld [vmem:[%s1 + $0xc] sm:$0xf]
    %v741 = vld [vmem:[%s1 + $0x10] sm:$0xf]
    %v742 = vld [vmem:[%s1 + $0x14] sm:$0xf]
    %v743 = vld [vmem:[%s1 + $0x18] sm:$0xf]
    %v744 = vld [vmem:[%s1 + $0x1c] sm:$0xf]
    %v745 = vld [vmem:[%s1 + $0x20] sm:$0xf]
    %v746 = vld [vmem:[%s1 + $0x24] sm:$0xf]
    %v747 = vld [vmem:[%s1 + $0x28] sm:$0xf]
    %v748 = vld [vmem:[%s1 + $0x2c] sm:$0xf]
    %v749 = vld [vmem:[%s1 + $0x30] sm:$0xf]
    %v750 = vld [vmem:[%s1 + $0x34] sm:$0xf]
    %v751 = vld [vmem:[%s1 + $0x38] sm:$0xf]
    %v752 = vld [vmem:[%s1 + $0x3c] sm:$0xf]
    %v753 = vld [vmem:[%s1 + $0x40] sm:$0xf]
    %v754 = vld [vmem:[%s1 + $0x44] sm:$0xf]
    %v755 = vld [vmem:[%s1 + $0x48] sm:$0xf]
    %v756 = vld [vmem:[%s1 + $0x4c] sm:$0xf]
    %v757 = vld [vmem:[%s1 + $0x50] sm:$0xf]
    %v758 = vld [vmem:[%s1 + $0x54] sm:$0xf]
    %v759 = vld [vmem:[%s1 + $0x58] sm:$0xf]
    %v760 = vld [vmem:[%s1 + $0x5c] sm:$0xf]
    %v761 = vld [vmem:[%s1 + $0x60] sm:$0xf]
    %v762 = vld [vmem:[%s1 + $0x64] sm:$0xf]
    %v763 = vld [vmem:[%s1 + $0x68] sm:$0xf]
    %v764 = vld [vmem:[%s1 + $0x6c] sm:$0xf]
    %v765 = vld [vmem:[%s1 + $0x70] sm:$0xf]
    %v766 = vld [vmem:[%s1 + $0x74] sm:$0xf]
    %v767 = vld [vmem:[%s1 + $0x78] sm:$0xf]
    %v768 = vld [vmem:[%s1 + $0x7c] sm:$0xf]
    %v769 = vld [vmem:[%s1 + $0x80] sm:$0xf]
    %v770 = vld [vmem:[%s1 + $0x84] sm:$0xf]
    %v771 = vld [vmem:[%s1 + $0x88] sm:$0xf]
    %v772 = vld [vmem:[%s1 + $0x8c] sm:$0xf]
    %v773 = vld [vmem:[%s1 + $0x90] sm:$0xf]
    %v774 = vld [vmem:[%s1 + $0x94] sm:$0xf]
    %v775 = vld [vmem:[%s1 + $0x98] sm:$0xf]
    %v776 = vld [vmem:[%s1 + $0x9c] sm:$0xf]
    %v777 = vld [vmem:[%s1 + $0xa0] sm:$0xf]
    %v778 = vld [vmem:[%s1 + $0xa4] sm:$0xf]
    %v779 = vld [vmem:[%s1 + $0xa8] sm:$0xf]
    %v780 = vld [vmem:[%s1 + $0xac] sm:$0xf]
    %v781 = vld [vmem:[%s1 + $0xb0] sm:$0xf]
    %v782 = vld [vmem:[%s1 + $0xb4] sm:$0xf]
    %v783 = vld [vmem:[%s1 + $0xb8] sm:$0xf]
    %v784 = vld [vmem:[%s1 + $0xbc] sm:$0xf]
    %v785 = vld [vmem:[%s1 + $0xc0] sm:$0xf]
    %v786 = vld [vmem:[%s1 + $0xc4] sm:$0xf]
    %v787 = vld [vmem:[%s1 + $0xc8] sm:$0xf]
    %v788 = vld [vmem:[%s1 + $0xcc] sm:$0xf]
    %v789 = vld [vmem:[%s1 + $0xd0] sm:$0xf]
    %v790 = vld [vmem:[%s1 + $0xd4] sm:$0xf]
    %v791 = vld [vmem:[%s1 + $0xd8] sm:$0xf]
    %v792 = vld [vmem:[%s1 + $0xdc] sm:$0xf]
    %v793 = vld [vmem:[%s1 + $0xe0] sm:$0xf]
    %v794 = vld [vmem:[%s1 + $0xe4] sm:$0xf]
    %v795 = vld [vmem:[%s1 + $0xe8] sm:$0xf]
    %v796 = vld [vmem:[%s1 + $0xec] sm:$0xf]
    %v797 = vld [vmem:[%s1 + $0xf0] sm:$0xf]
    %v798 = vld [vmem:[%s1 + $0xf4] sm:$0xf]
    %v799 = vld [vmem:[%s1 + $0xf8] sm:$0xf]
    %v800 = vld [vmem:[%s1 + $0xfc] sm:$0xf]
    %v801 = vunpack.c.l.bf16 %v737
    %v802 = vunpack.c.l.bf16 %v738
    %v803 = vunpack.c.l.bf16 %v739
    %v804 = vunpack.c.l.bf16 %v740
    %v805 = vunpack.c.l.bf16 %v741
    %v806 = vunpack.c.l.bf16 %v742
    %v807 = vunpack.c.l.bf16 %v743
    %v808 = vunpack.c.l.bf16 %v744
    %v809 = vunpack.c.l.bf16 %v745
    %v810 = vunpack.c.l.bf16 %v746
    %v811 = vunpack.c.l.bf16 %v747
    %v812 = vunpack.c.l.bf16 %v748
    %v813 = vunpack.c.l.bf16 %v749
    %v814 = vunpack.c.l.bf16 %v750
    %v815 = vunpack.c.l.bf16 %v751
    %v816 = vunpack.c.l.bf16 %v752
    %v817 = vunpack.c.l.bf16 %v753
    %v818 = vunpack.c.l.bf16 %v754
    %v819 = vunpack.c.l.bf16 %v755
    %v820 = vunpack.c.l.bf16 %v756
    %v821 = vunpack.c.l.bf16 %v757
    %v822 = vunpack.c.l.bf16 %v758
    %v823 = vunpack.c.l.bf16 %v759
    %v824 = vunpack.c.l.bf16 %v760
    %v825 = vunpack.c.l.bf16 %v761
    %v826 = vunpack.c.l.bf16 %v762
    %v827 = vunpack.c.l.bf16 %v763
    %v828 = vunpack.c.l.bf16 %v764
    %v829 = vunpack.c.l.bf16 %v765
    %v830 = vunpack.c.l.bf16 %v766
    %v831 = vunpack.c.l.bf16 %v767
    %v832 = vunpack.c.l.bf16 %v768
    %v833 = vunpack.c.l.bf16 %v769
    %v834 = vunpack.c.l.bf16 %v770
    %v835 = vunpack.c.l.bf16 %v771
    %v836 = vunpack.c.l.bf16 %v772
    %v837 = vunpack.c.l.bf16 %v773
    %v838 = vunpack.c.l.bf16 %v774
    %v839 = vunpack.c.l.bf16 %v775
    %v840 = vunpack.c.l.bf16 %v776
    %v841 = vunpack.c.l.bf16 %v777
    %v842 = vunpack.c.l.bf16 %v778
    %v843 = vunpack.c.l.bf16 %v779
    %v844 = vunpack.c.l.bf16 %v780
    %v845 = vunpack.c.l.bf16 %v781
    %v846 = vunpack.c.l.bf16 %v782
    %v847 = vunpack.c.l.bf16 %v783
    %v848 = vunpack.c.l.bf16 %v784
    %v849 = vunpack.c.l.bf16 %v785
    %v850 = vunpack.c.l.bf16 %v786
    %v851 = vunpack.c.l.bf16 %v787
    %v852 = vunpack.c.l.bf16 %v788
    %v853 = vunpack.c.l.bf16 %v789
    %v854 = vunpack.c.l.bf16 %v790
    %v855 = vunpack.c.l.bf16 %v791
    %v856 = vunpack.c.l.bf16 %v792
    %v857 = vunpack.c.l.bf16 %v793
    %v858 = vunpack.c.l.bf16 %v794
    %v859 = vunpack.c.l.bf16 %v795
    %v860 = vunpack.c.l.bf16 %v796
    %v861 = vunpack.c.l.bf16 %v797
    %v862 = vunpack.c.l.bf16 %v798
    %v863 = vunpack.c.l.bf16 %v799
    %v864 = vunpack.c.l.bf16 %v800
    %v865 = vmul.f32 %v801, %v673
    %v866 = vmul.f32 %v802, %v674
    %v867 = vmul.f32 %v803, %v675
    %v868 = vmul.f32 %v804, %v676
    %v869 = vmul.f32 %v805, %v677
    %v870 = vmul.f32 %v806, %v678
    %v871 = vmul.f32 %v807, %v679
    %v872 = vmul.f32 %v808, %v680
    %v873 = vmul.f32 %v809, %v681
    %v874 = vmul.f32 %v810, %v682
    %v875 = vmul.f32 %v811, %v683
    %v876 = vmul.f32 %v812, %v684
    %v877 = vmul.f32 %v813, %v685
    %v878 = vmul.f32 %v814, %v686
    %v879 = vmul.f32 %v815, %v687
    %v880 = vmul.f32 %v816, %v688
    %v881 = vmul.f32 %v817, %v689
    %v882 = vmul.f32 %v818, %v690
    %v883 = vmul.f32 %v819, %v691
    %v884 = vmul.f32 %v820, %v692
    %v885 = vmul.f32 %v821, %v693
    %v886 = vmul.f32 %v822, %v694
    %v887 = vmul.f32 %v823, %v695
    %v888 = vmul.f32 %v824, %v696
    %v889 = vmul.f32 %v825, %v697
    %v890 = vmul.f32 %v826, %v698
    %v891 = vmul.f32 %v827, %v699
    %v892 = vmul.f32 %v828, %v700
    %v893 = vmul.f32 %v829, %v701
    %v894 = vmul.f32 %v830, %v702
    %v895 = vmul.f32 %v831, %v703
    %v896 = vmul.f32 %v832, %v704
    %v897 = vmul.f32 %v833, %v705
    %v898 = vmul.f32 %v834, %v706
    %v899 = vmul.f32 %v835, %v707
    %v900 = vmul.f32 %v836, %v708
    %v901 = vmul.f32 %v837, %v709
    %v902 = vmul.f32 %v838, %v710
    %v903 = vmul.f32 %v839, %v711
    %v904 = vmul.f32 %v840, %v712
    %v905 = vmul.f32 %v841, %v713
    %v906 = vmul.f32 %v842, %v714
    %v907 = vmul.f32 %v843, %v715
    %v908 = vmul.f32 %v844, %v716
    %v909 = vmul.f32 %v845, %v717
    %v910 = vmul.f32 %v846, %v718
    %v911 = vmul.f32 %v847, %v719
    %v912 = vmul.f32 %v848, %v720
    %v913 = vmul.f32 %v849, %v721
    %v914 = vmul.f32 %v850, %v722
    %v915 = vmul.f32 %v851, %v723
    %v916 = vmul.f32 %v852, %v724
    %v917 = vmul.f32 %v853, %v725
    %v918 = vmul.f32 %v854, %v726
    %v919 = vmul.f32 %v855, %v727
    %v920 = vmul.f32 %v856, %v728
    %v921 = vmul.f32 %v857, %v729
    %v922 = vmul.f32 %v858, %v730
    %v923 = vmul.f32 %v859, %v731
    %v924 = vmul.f32 %v860, %v732
    %v925 = vmul.f32 %v861, %v733
    %v926 = vmul.f32 %v862, %v734
    %v927 = vmul.f32 %v863, %v735
    %v928 = vmul.f32 %v864, %v736
    %v929 = vpack.c.bf16 %v866, %v865
    %v930 = vpack.c.bf16 %v868, %v867
    %v931 = vpack.c.bf16 %v870, %v869
    %v932 = vpack.c.bf16 %v872, %v871
    %v933 = vpack.c.bf16 %v874, %v873
    %v934 = vpack.c.bf16 %v876, %v875
    %v935 = vpack.c.bf16 %v878, %v877
    %v936 = vpack.c.bf16 %v880, %v879
    %v937 = vpack.c.bf16 %v882, %v881
    %v938 = vpack.c.bf16 %v884, %v883
    %v939 = vpack.c.bf16 %v886, %v885
    %v940 = vpack.c.bf16 %v888, %v887
    %v941 = vpack.c.bf16 %v890, %v889
    %v942 = vpack.c.bf16 %v892, %v891
    %v943 = vpack.c.bf16 %v894, %v893
    %v944 = vpack.c.bf16 %v896, %v895
    %v945 = vpack.c.bf16 %v898, %v897
    %v946 = vpack.c.bf16 %v900, %v899
    %v947 = vpack.c.bf16 %v902, %v901
    %v948 = vpack.c.bf16 %v904, %v903
    %v949 = vpack.c.bf16 %v906, %v905
    %v950 = vpack.c.bf16 %v908, %v907
    %v951 = vpack.c.bf16 %v910, %v909
    %v952 = vpack.c.bf16 %v912, %v911
    %v953 = vpack.c.bf16 %v914, %v913
    %v954 = vpack.c.bf16 %v916, %v915
    %v955 = vpack.c.bf16 %v918, %v917
    %v956 = vpack.c.bf16 %v920, %v919
    %v957 = vpack.c.bf16 %v922, %v921
    %v958 = vpack.c.bf16 %v924, %v923
    %v959 = vpack.c.bf16 %v926, %v925
    %v960 = vpack.c.bf16 %v928, %v927
    %v961 = vld [vmem:[%s2] sm:$0xf]
    %v962 = vlaneseq
    %v963 = vshrl.u32 %v962, 7
    %v964 = vadd.s32 %v963, 8
    %v965 = vadd.s32 %v963, 16
    %s966 = smul.u32 0, 24
    %v967 = vstv %s966
    %v968 = vadd.s32 %v963, %v967
    %v969 = vadd.s32 %v964, %v967
    %v970 = vadd.s32 %v965, %v967
    %v971 = vlaneseq
    %v972 = vshrl.u32 %v971, 7
    %v973 = vsub.s32 0, %v972
    %v974 = vrot.slane %v961, %v973
    %v975 = vlaneseq
    %v976 = vshrl.u32 %v975, 7
    %v977 = vsub.s32 1, %v976
    %v978 = vrot.slane %v961, %v977
    %v979 = vlaneseq
    %v980 = vshrl.u32 %v979, 7
    %v981 = vsub.s32 2, %v980
    %v982 = vrot.slane %v961, %v981
    %v983 = vlaneseq
    %v984 = vshrl.u32 %v983, 7
    %v985 = vsub.s32 3, %v984
    %v986 = vrot.slane %v961, %v985
    %vm987 = vcmp.eq.s32.totalorder %v968, %v974
    %vm988 = vcmp.eq.s32.totalorder %v968, %v978
    %vm989 = vcmp.eq.s32.totalorder %v968, %v982
    %vm990 = vcmp.eq.s32.totalorder %v968, %v986
    %vm991 = vcmp.eq.s32.totalorder %v969, %v974
    %vm992 = vcmp.eq.s32.totalorder %v969, %v978
    %vm993 = vcmp.eq.s32.totalorder %v969, %v982
    %vm994 = vcmp.eq.s32.totalorder %v969, %v986
    %vm995 = vcmp.eq.s32.totalorder %v970, %v974
    %vm996 = vcmp.eq.s32.totalorder %v970, %v978
    %vm997 = vcmp.eq.s32.totalorder %v970, %v982
    %vm998 = vcmp.eq.s32.totalorder %v970, %v986
    %v999 = vsel %vm987, 1, 0
    %v1000 = vsel %vm988, 1, 0
    %v1001 = vsel %vm989, 1, 0
    %v1002 = vsel %vm990, 1, 0
    %v1003 = vsel %vm991, 1, 0
    %v1004 = vsel %vm992, 1, 0
    %v1005 = vsel %vm993, 1, 0
    %v1006 = vsel %vm994, 1, 0
    %v1007 = vsel %vm995, 1, 0
    %v1008 = vsel %vm996, 1, 0
    %v1009 = vsel %vm997, 1, 0
    %v1010 = vsel %vm998, 1, 0
    %v1011 = vcvt.s32.f32 %v999
    %v1012 = vcvt.s32.f32 %v1000
    %v1013 = vcvt.s32.f32 %v1001
    %v1014 = vcvt.s32.f32 %v1002
    %v1015 = vcvt.s32.f32 %v1003
    %v1016 = vcvt.s32.f32 %v1004
    %v1017 = vcvt.s32.f32 %v1005
    %v1018 = vcvt.s32.f32 %v1006
    %v1019 = vcvt.s32.f32 %v1007
    %v1020 = vcvt.s32.f32 %v1008
    %v1021 = vcvt.s32.f32 %v1009
    %v1022 = vcvt.s32.f32 %v1010
    %v1023 = vpack.c.bf16 %v1015, %v1011
    %v1024 = vpack.c.bf16 %v1016, %v1012
    %v1025 = vpack.c.bf16 %v1017, %v1013
    %v1026 = vpack.c.bf16 %v1018, %v1014
    %v1027 = vpack.c.bf16 %v1019, %v1019
    %v1028 = vpack.c.bf16 %v1020, %v1020
    %v1029 = vpack.c.bf16 %v1021, %v1021
    %v1030 = vpack.c.bf16 %v1022, %v1022
    %v1031 = vld [vmem:[#allocation2] sm:$0xff]
    %v1032 = vld [vmem:[#allocation2 + $0x8] sm:$0xff]
    %v1033 = vld [vmem:[#allocation2 + $0x10] sm:$0xff]
    %1034 = vmatprep.subr.bf16.mxu0 0
    %1035 = vmatpush1.bf16.msra.mxu0 %v929
    %1036 = vmatprep.subr.bf16.mxu0 0
    %1037 = vmatpush1.bf16.msra.mxu0 %v930
    %1038 = vmatprep.subr.bf16.mxu0 0
    %1039 = vmatpush1.bf16.msra.mxu0 %v931
    %1040 = vmatprep.subr.bf16.mxu0 0
    %1041 = vmatpush1.bf16.msra.mxu0 %v932
    %1042 = vmatprep.subr.bf16.mxu0 0
    %1043 = vmatpush1.bf16.msra.mxu0 %v933
    %1044 = vmatprep.subr.bf16.mxu0 0
    %1045 = vmatpush1.bf16.msra.mxu0 %v934
    %1046 = vmatprep.subr.bf16.mxu0 0
    %1047 = vmatpush1.bf16.msra.mxu0 %v935
    %1048 = vmatprep.subr.bf16.mxu0 0
    %1049 = vmatpush1.bf16.msra.mxu0 %v936
    %1050 = vmatprep.subr.bf16.mxu0 0
    %1051 = vmatpush1.bf16.msra.mxu0 %v937
    %1052 = vmatprep.subr.bf16.mxu0 0
    %1053 = vmatpush1.bf16.msra.mxu0 %v938
    %1054 = vmatprep.subr.bf16.mxu0 0
    %1055 = vmatpush1.bf16.msra.mxu0 %v939
    %1056 = vmatprep.subr.bf16.mxu0 0
    %1057 = vmatpush1.bf16.msra.mxu0 %v940
    %1058 = vmatprep.subr.bf16.mxu0 0
    %1059 = vmatpush1.bf16.msra.mxu0 %v941
    %1060 = vmatprep.subr.bf16.mxu0 0
    %1061 = vmatpush1.bf16.msra.mxu0 %v942
    %1062 = vmatprep.subr.bf16.mxu0 0
    %1063 = vmatpush1.bf16.msra.mxu0 %v943
    %1064 = vmatprep.subr.bf16.mxu0 0
    %1065 = vmatpush1.bf16.msra.mxu0 %v944
    %1066 = vmatprep.mubr.bf16.mxu0 %v1024
    %1067 = vmatmul.mubr.bf16.gmra.mrb[0].mxu0 %v1023
    %v1068 = vpop.f32.mrb[0].mxu0
    %v1069 = vadd.f32 0.0, %v1068
    %v1070 = vpop.f32.mrb[0].mxu0
    %v1071 = vpop.f32.mrb[0].mxu0
    %v1072 = vadd.f32 0.0, %v1071
    %v1073 = vpop.f32.mrb[0].mxu0
    %1074 = vmatprep.mubr.bf16.mxu0 %v1028
    %1075 = vmatmul.mubr.bf16.gmra.mrb[0].mxu0 %v1027
    %v1076 = vpop.f32.mrb[0].mxu0
    %v1077 = vadd.f32 0.0, %v1076
    %v1078 = vpop.f32.mrb[0].mxu0
    %v1079 = vpop.f32.mrb[0].mxu0
    %v1080 = vpop.f32.mrb[0].mxu0
    %1081 = vdwg.mxu0
    %1082 = vmatprep.subr.bf16.mxu0 0
    %1083 = vmatpush1.bf16.msra.mxu0 %v945
    %1084 = vmatprep.subr.bf16.mxu0 0
    %1085 = vmatpush1.bf16.msra.mxu0 %v946
    %1086 = vmatprep.subr.bf16.mxu0 0
    %1087 = vmatpush1.bf16.msra.mxu0 %v947
    %1088 = vmatprep.subr.bf16.mxu0 0
    %1089 = vmatpush1.bf16.msra.mxu0 %v948
    %1090 = vmatprep.subr.bf16.mxu0 0
    %1091 = vmatpush1.bf16.msra.mxu0 %v949
    %1092 = vmatprep.subr.bf16.mxu0 0
    %1093 = vmatpush1.bf16.msra.mxu0 %v950
    %1094 = vmatprep.subr.bf16.mxu0 0
    %1095 = vmatpush1.bf16.msra.mxu0 %v951
    %1096 = vmatprep.subr.bf16.mxu0 0
    %1097 = vmatpush1.bf16.msra.mxu0 %v952
    %1098 = vmatprep.subr.bf16.mxu0 0
    %1099 = vmatpush1.bf16.msra.mxu0 %v953
    %1100 = vmatprep.subr.bf16.mxu0 0
    %1101 = vmatpush1.bf16.msra.mxu0 %v954
    %1102 = vmatprep.subr.bf16.mxu0 0
    %1103 = vmatpush1.bf16.msra.mxu0 %v955
    %1104 = vmatprep.subr.bf16.mxu0 0
    %1105 = vmatpush1.bf16.msra.mxu0 %v956
    %1106 = vmatprep.subr.bf16.mxu0 0
    %1107 = vmatpush1.bf16.msra.mxu0 %v957
    %1108 = vmatprep.subr.bf16.mxu0 0
    %1109 = vmatpush1.bf16.msra.mxu0 %v958
    %1110 = vmatprep.subr.bf16.mxu0 0
    %1111 = vmatpush1.bf16.msra.mxu0 %v959
    %1112 = vmatprep.subr.bf16.mxu0 0
    %1113 = vmatpush1.bf16.msra.mxu0 %v960
    %1114 = vmatprep.mubr.bf16.mxu0 %v1026
    %1115 = vmatmul.mubr.bf16.gmra.mrb[0].mxu0 %v1025
    %v1116 = vpop.f32.mrb[0].mxu0
    %v1117 = vadd.f32 %v1069, %v1116
    %v1118 = vpop.f32.mrb[0].mxu0
    %v1119 = vpop.f32.mrb[0].mxu0
    %v1120 = vadd.f32 %v1072, %v1119
    %v1121 = vpop.f32.mrb[0].mxu0
    %1122 = vmatprep.mubr.bf16.mxu0 %v1030
    %1123 = vmatmul.mubr.bf16.gmra.mrb[0].mxu0 %v1029
    %v1124 = vpop.f32.mrb[0].mxu0
    %v1125 = vadd.f32 %v1077, %v1124
    %v1126 = vpop.f32.mrb[0].mxu0
    %v1127 = vpop.f32.mrb[0].mxu0
    %v1128 = vpop.f32.mrb[0].mxu0
    %1129 = vdwg.mxu0
    %v1130 = vadd.f32 %v1031, %v1117
    %v1131 = vadd.f32 %v1032, %v1120
    %v1132 = vadd.f32 %v1033, %v1125
    %1133 = vst [vmem:[#allocation2] sm:$0xff] %v1130
    %1134 = vst [vmem:[#allocation2 + $0x8] sm:$0xff] %v1131
    %1135 = vst [vmem:[#allocation2 + $0x10] sm:$0xff] %v1132
    // Predicated region
    $region46: #{tpu_custom_call.1} parent=1 // pred_check
      %p1136 = pneg %p48
    $region47: #{tpu_custom_call.1} parent=1 // pred_check_branch
      %1138 = sbr.rel (%p1136) target = $region49
    $region48: #{tpu_custom_call.1} parent=1 // pred_region
      %v1139 = vld [vmem:[%s4] sm:$0xf]
      %v1140 = vld [vmem:[%s4 + $0x4] sm:$0xf]
      %v1141 = vld [vmem:[%s4 + $0x8] sm:$0xf]
      %v1142 = vld [vmem:[%s5] sm:$0xf]
      %v1143 = vld [vmem:[%s5 + $0x4] sm:$0x3]
      %v1144 = vld [vmem:[%s7] sm:$0x1]
      %v1146 = vlaneseq
      %v1147 = vshrl.u32 %v1146, 7
      %v1148 = vsub.s32 0, %v1147
      %v1149 = vrot.slane %v1144, %v1148
      %v1154 = vunpack.c.l.b16 %v1139
      %v1155 = vunpack.c.l.b16 %v1140
      %v1156 = vunpack.c.l.b16 %v1141
      %v1157 = vpack.c.b16 %v1155, %v1154
      %v1158 = vpack.c.b16 %v1156, %v1156
      %v1161 = vunpack.c.l.b16 %v1142
      %v1162 = vunpack.c.l.b16 %v1143
      %v1163 = vpack.c.b16 %v1162, %v1161
      %vm1164 = vcmask 97280
      %v1166 = vsel %vm1164, %v1157, 0
      %v1169 = vsel %vm1164, %v1158, 0
      %vm1171 = vcmask 1045504
      %v1173 = vsel %vm1171, %v1163, 0
      %1175 = vmatprep.subr.bf16.mxu0 0
      %1176 = vmatpush1.bf16.msra.mxu0 %v1173
      %1177 = vmatprep.subr.bf16.mxu0 0
      %1178 = vmatpush1.bf16.msra.mxu0 0
      %1179 = vmatprep.subr.bf16.mxu0 0
      %1180 = vmatpush1.bf16.msra.mxu0 0
      %1181 = vmatprep.subr.bf16.mxu0 0
      %1182 = vmatpush1.bf16.msra.mxu0 0
      %1183 = vmatprep.subr.bf16.mxu0 0
      %1184 = vmatpush1.bf16.msra.mxu0 0
      %1185 = vmatprep.subr.bf16.mxu0 0
      %1186 = vmatpush1.bf16.msra.mxu0 0
      %1187 = vmatprep.subr.bf16.mxu0 0
      %1188 = vmatpush1.bf16.msra.mxu0 0
      %1189 = vmatprep.subr.bf16.mxu0 0
      %1190 = vmatpush1.bf16.msra.mxu0 0
      %1191 = vmatprep.subr.bf16.mxu0 0
      %1192 = vmatpush1.bf16.msra.mxu0 0
      %1193 = vmatprep.subr.bf16.mxu0 0
      %1194 = vmatpush1.bf16.msra.mxu0 0
      %1195 = vmatprep.subr.bf16.mxu0 0
      %1196 = vmatpush1.bf16.msra.mxu0 0
      %1197 = vmatprep.subr.bf16.mxu0 0
      %1198 = vmatpush1.bf16.msra.mxu0 0
      %1199 = vmatprep.subr.bf16.mxu0 0
      %1200 = vmatpush1.bf16.msra.mxu0 0
      %1201 = vmatprep.subr.bf16.mxu0 0
      %1202 = vmatpush1.bf16.msra.mxu0 0
      %1203 = vmatprep.subr.bf16.mxu0 0
      %1204 = vmatpush1.bf16.msra.mxu0 0
      %1205 = vmatprep.subr.bf16.mxu0 0
      %1206 = vmatpush1.bf16.msra.mxu0 0
      %1207 = vmatprep.mubr.bf16.mxu0 0
      %1208 = vmatmul.mubr.bf16.gmra.mrb[0].mxu0 %v1166
      %v1209 = vpop.f32.mrb[0].mxu0
      %v1210 = vadd.f32 %v1149, %v1209
      %v1211 = vpop.f32.mrb[0].mxu0
      %v1212 = vpop.f32.mrb[0].mxu0
      %v1213 = vadd.f32 %v1149, %v1212
      %v1214 = vpop.f32.mrb[0].mxu0
      %1215 = vmatprep.mubr.bf16.mxu0 0
      %1216 = vmatmul.mubr.bf16.gmra.mrb[0].mxu0 %v1169
      %v1217 = vpop.f32.mrb[0].mxu0
      %v1218 = vadd.f32 %v1149, %v1217
      %v1219 = vpop.f32.mrb[0].mxu0
      %v1220 = vpop.f32.mrb[0].mxu0
      %v1221 = vpop.f32.mrb[0].mxu0
      %1222 = vdwg.mxu0
      %v1223 = vmax.f32 %v1210, 0.0
      %v1224 = vmax.f32 %v1213, 0.0
      %v1225 = vmax.f32 %v1218, 0.0
      %v1226 = vld [vmem:[#allocation2] sm:$0xff]
      %v1227 = vld [vmem:[#allocation2 + $0x8] sm:$0xff]
      %v1228 = vld [vmem:[#allocation2 + $0x10] sm:$0xff]
      %v1229 = vpack.c.bf16 %v1227, %v1226
      %v1230 = vpack.c.bf16 %v1228, %v1228
      %v1231 = vld [vmem:[#allocation3] sm:$0xf]
      %v1232 = vld [vmem:[#allocation3 + $0x4] sm:$0xf]
      %v1233 = vld [vmem:[#allocation3 + $0x8] sm:$0xf]
      %v1234 = vld [vmem:[#allocation3 + $0xc] sm:$0xf]
      %v1235 = vld [vmem:[#allocation3 + $0x10] sm:$0xf]
      %v1236 = vld [vmem:[#allocation3 + $0x14] sm:$0xf]
      %v1237 = vld [vmem:[#allocation3 + $0x18] sm:$0xf]
      %v1238 = vld [vmem:[#allocation3 + $0x1c] sm:$0xf]
      %v1239 = vld [vmem:[#allocation3 + $0x20] sm:$0xf]
      %v1240 = vld [vmem:[#allocation3 + $0x24] sm:$0xf]
      %v1241 = vld [vmem:[#allocation3 + $0x28] sm:$0xf]
      %v1242 = vld [vmem:[#allocation3 + $0x2c] sm:$0xf]
      %v1243 = vld [vmem:[#allocation3 + $0x30] sm:$0xf]
      %v1244 = vld [vmem:[#allocation3 + $0x34] sm:$0xf]
      %v1245 = vld [vmem:[#allocation3 + $0x38] sm:$0xf]
      %v1246 = vld [vmem:[#allocation3 + $0x3c] sm:$0xf]
      %v1247 = vld [vmem:[%s8] sm:$0x1]
      %v1249 = vlaneseq
      %v1250 = vshrl.u32 %v1249, 7
      %v1251 = vsub.s32 0, %v1250
      %v1252 = vrot.slane %v1247, %v1251
      %v1270 = vunpack.c.l.b16 %v1231
      %v1271 = vunpack.c.l.b16 %v1232
      %v1272 = vunpack.c.l.b16 %v1233
      %v1273 = vunpack.c.l.b16 %v1234
      %v1274 = vunpack.c.l.b16 %v1235
      %v1275 = vunpack.c.l.b16 %v1236
      %v1276 = vunpack.c.l.b16 %v1237
      %v1277 = vunpack.c.l.b16 %v1238
      %v1278 = vunpack.c.l.b16 %v1239
      %v1279 = vunpack.c.l.b16 %v1240
      %v1280 = vunpack.c.l.b16 %v1241
      %v1281 = vunpack.c.l.b16 %v1242
      %v1282 = vunpack.c.l.b16 %v1243
      %v1283 = vunpack.c.l.b16 %v1244
      %v1284 = vunpack.c.l.b16 %v1245
      %v1285 = vunpack.c.l.b16 %v1246
      %v1286 = vpack.c.b16 %v1271, %v1270
      %v1287 = vpack.c.b16 %v1273, %v1272
      %v1288 = vpack.c.b16 %v1275, %v1274
      %v1289 = vpack.c.b16 %v1277, %v1276
      %v1290 = vpack.c.b16 %v1279, %v1278
      %v1291 = vpack.c.b16 %v1281, %v1280
      %v1292 = vpack.c.b16 %v1283, %v1282
      %v1293 = vpack.c.b16 %v1285, %v1284
      %1302 = vmatprep.subr.bf16.mxu0 0
      %1303 = vmatpush1.bf16.msra.mxu0 %v1286
      %1304 = vmatprep.subr.bf16.mxu0 0
      %1305 = vmatpush1.bf16.msra.mxu0 %v1287
      %1306 = vmatprep.subr.bf16.mxu0 0
      %1307 = vmatpush1.bf16.msra.mxu0 %v1288
      %1308 = vmatprep.subr.bf16.mxu0 0
      %1309 = vmatpush1.bf16.msra.mxu0 %v1289
      %1310 = vmatprep.subr.bf16.mxu0 0
      %1311 = vmatpush1.bf16.msra.mxu0 %v1290
      %1312 = vmatprep.subr.bf16.mxu0 0
      %1313 = vmatpush1.bf16.msra.mxu0 %v1291
      %1314 = vmatprep.subr.bf16.mxu0 0
      %1315 = vmatpush1.bf16.msra.mxu0 %v1292
      %1316 = vmatprep.subr.bf16.mxu0 0
      %1317 = vmatpush1.bf16.msra.mxu0 %v1293
      %1318 = vmatprep.subr.bf16.mxu0 0
      %1319 = vmatpush1.bf16.msra.mxu0 0
      %1320 = vmatprep.subr.bf16.mxu0 0
      %1321 = vmatpush1.bf16.msra.mxu0 0
      %1322 = vmatprep.subr.bf16.mxu0 0
      %1323 = vmatpush1.bf16.msra.mxu0 0
      %1324 = vmatprep.subr.bf16.mxu0 0
      %1325 = vmatpush1.bf16.msra.mxu0 0
      %1326 = vmatprep.subr.bf16.mxu0 0
      %1327 = vmatpush1.bf16.msra.mxu0 0
      %1328 = vmatprep.subr.bf16.mxu0 0
      %1329 = vmatpush1.bf16.msra.mxu0 0
      %1330 = vmatprep.subr.bf16.mxu0 0
      %1331 = vmatpush1.bf16.msra.mxu0 0
      %1332 = vmatprep.subr.bf16.mxu0 0
      %1333 = vmatpush1.bf16.msra.mxu0 0
      %1334 = vmatprep.mubr.bf16.mxu0 0
      %1335 = vmatmul.mubr.bf16.gmra.mrb[0].mxu0 %v1229
      %v1336 = vpop.f32.mrb[0].mxu0
      %v1337 = vadd.f32 %v1252, %v1336
      %v1338 = vpop.f32.mrb[0].mxu0
      %v1339 = vpop.f32.mrb[0].mxu0
      %v1340 = vadd.f32 %v1252, %v1339
      %v1341 = vpop.f32.mrb[0].mxu0
      %1342 = vmatprep.mubr.bf16.mxu0 0
      %1343 = vmatmul.mubr.bf16.gmra.mrb[0].mxu0 %v1230
      %v1344 = vpop.f32.mrb[0].mxu0
      %v1345 = vadd.f32 %v1252, %v1344
      %v1346 = vpop.f32.mrb[0].mxu0
      %v1347 = vpop.f32.mrb[0].mxu0
      %v1348 = vpop.f32.mrb[0].mxu0
      %1349 = vdwg.mxu0
      %v1350 = vmax.f32 %v1337, 0.0
      %v1351 = vmax.f32 %v1340, 0.0
      %v1352 = vmax.f32 %v1345, 0.0
      %v1353 = vadd.f32 %v1223, %v1350
      %v1354 = vadd.f32 %v1224, %v1351
      %v1355 = vadd.f32 %v1225, %v1352
      %v1356 = vmax.f32 %v1353, 0.0
      %v1357 = vmax.f32 %v1354, 0.0
      %v1358 = vmax.f32 %v1355, 0.0
      %v1359 = vmul.f32 %v1356, %v1356
      %v1360 = vmul.f32 %v1357, %v1357
      %v1361 = vmul.f32 %v1358, %v1358
      %1362 = vadd.xlane.f32.xlu0 %v1359
      %v1363 = vpop.xlane.xlu0 %1362
      %1364 = vadd.xlane.f32.xlu0 %v1360
      %v1365 = vpop.xlane.xlu0 %1364
      %1366 = vadd.xlane.f32.xlu0 %v1361
      %v1367 = vpop.xlane.xlu0 %1366
      %vm1368 = vcmp.gt.f32.partialorder %v1363, 0.0
      %vm1369 = vcmp.gt.f32.partialorder %v1365, 0.0
      %vm1370 = vcmp.gt.f32.partialorder %v1367, 0.0
      %v1371 = vrsqrt.pop %v1363
      %v1372 = vrsqrt.pop %v1365
      %v1373 = vrsqrt.pop %v1367
      %v1374 = vsel %vm1368, %v1371, 1.0
      %v1375 = vsel %vm1369, %v1372, 1.0
      %v1376 = vsel %vm1370, %v1373, 1.0
      %v1377 = vmul.f32 %v1356, %v1374
      %v1378 = vmul.f32 %v1357, %v1375
      %v1379 = vmul.f32 %v1358, %v1376
      %1380 = vst [vmem:[#allocation6] sm:$0xff] %v1377
      %1381 = vst [vmem:[#allocation6 + $0x8] sm:$0xff] %v1378
      %1382 = vst [vmem:[#allocation6 + $0x10] sm:$0xff] %v1379
    $region49: #{tpu_custom_call.1} parent=1 // pred_fallthru
      _
    // Predicated region
    $region50: #{tpu_custom_call.1} parent=1 // pred_check
      _
    $region51: #{tpu_custom_call.1} parent=1 // pred_check_branch
      %1384 = sbr.rel (0) target = $region53
    $region52: #{tpu_custom_call.1} parent=1 // pred_region
      %s1386 = ssub.s32 384, 384
      %1387 = vsyncadd [#allocation5], %s1386
      %s1388 = sshll.u32 [#allocation6], 4
      %s1389 = int_to_ptr.vmem [resolvable:$true] %s1388
      %1394 = dma.vmem_to_hbm [thread:$0]  %s1389, 384, %s9, [#allocation5], 128, 128, 8
    $region53: #{tpu_custom_call.1} parent=1 // pred_fallthru
      _
    // Predicated region
    $region54: #{tpu_custom_call.1} parent=1 // pred_check
      _
    $region55: #{tpu_custom_call.1} parent=1 // pred_check_branch
      %1396 = sbr.rel (0) target = $region57
    $region56: #{tpu_custom_call.1} parent=1 // pred_region
      %1397 = dma.done [#allocation5], 384
    $region57: #{tpu_custom_call.1} parent=1 // pred_fallthru
      _
    %1398 = vsyncpa [#allocation4], 1
    %1399 = vsyncpa [#allocation5], 1

</llo_original>
